<compile_context>
chip_gen: v5e
topology: v5e:2x2
jax: 0.10.0
libtpu: 0.0.40
codegen_flags: <defaults>
</compile_context>

<pallas_src>
import functools

import jax
import jax.numpy as jnp
from jax import lax
from jax.experimental import pallas as pl
from jax.experimental.pallas import tpu as pltpu

EPS = 1e-4      # BiFPN epsilon (module default)
BN_EPS = 1e-3   # ultralytics Conv -> BatchNorm2d(eps=0.001)


def _pair_max(x, level, fwd_mask):
    """result[..., s] = max(x[..., s], x[..., partner(s)]).

    `fwd_mask` (hoisted, built once per tile) says whether the partner sits at
    +level or -level lanes.  Tile alignment (enforced by the wrapper) keeps the
    cyclic roll from ever selecting a value from a foreign pool block."""
    fwd = jnp.roll(x, -level, axis=-1)
    bwd = jnp.roll(x, level, axis=-1)
    return jnp.maximum(x, jnp.where(fwd_mask, fwd, bwd))


def _bifpn_kernel(w1_ref, w2_ref, wk3_ref, wk4_ref, wk5_ref, wb_ref,
                  up_ref, hmod4_ref, p3_ref, p4_ref, p5_ref, out_ref, *, width):
    f32 = jnp.float32

    # --- normalized fusion weights (scalars in SMEM) --------------------------
    a0 = jnp.maximum(w1_ref[0], 0.0)
    a1 = jnp.maximum(w1_ref[1], 0.0)
    s1 = a0 + a1 + EPS
    w10, w11 = a0 / s1, a1 / s1

    b0 = jnp.maximum(w2_ref[0], 0.0)
    b1 = jnp.maximum(w2_ref[1], 0.0)
    b2 = jnp.maximum(w2_ref[2], 0.0)
    s2 = b0 + b1 + b2 + EPS
    w20, w21, w22 = b0 / s2, b1 / s2, b2 / s2

    # --- inputs (native dtype from HBM, upcast once in VMEM) ------------------
    x3 = p3_ref[...].astype(f32)                                  # (C, S)
    p4c = p4_ref[...].astype(f32)                                 # (C, S/4) raw P4
    v5 = jnp.broadcast_to(p5_ref[...].astype(f32), x3.shape)      # (C, S)  1x1 P5

    # --- hoisted pair-max select masks (once per tile, no int division) -------
    s_tile = x3.shape[-1]
    lane = lax.broadcasted_iota(jnp.int32, (1, s_tile), 1)
    hmod4 = hmod4_ref[...]                     # per-lane fine-row index mod 4
    m_col1 = (lane & 1) == 0                   # column-pair partner direction
    m_col2 = (lane & 2) == 0                   # column-quad partner direction (W%4==0)
    m_row1 = (hmod4 & 1) == 0                  # row-pair partner direction
    m_row2 = (hmod4 & 2) == 0                  # row-quad partner direction

    # --- in-kernel nearest 2x upsample of raw P4 (exact replication matmul) ---
    # each column of up_ref holds a single 1.0 at the source coarse pixel.
    u4 = jnp.dot(p4c, up_ref[...], preferred_element_type=f32)    # (C, S)

    # --- top-down pass ---------------------------------------------------------
    m = w10 * u4 + w11 * v5                    # == up2(P4_td)
    t3 = w10 * x3 + w11 * m                    # == P3_td

    # --- bottom-up pass (maxpool2 + nearest-up == in-block max + replicate) ----
    p3_down_up = _pair_max(_pair_max(t3, 1, m_col1), width, m_row1)   # up2(pool2(P3_td))
    q4 = w20 * m + w21 * p3_down_up + w22 * v5                        # == up2(P4_bu)
    # q4 is constant over every 2x2 block -> 4x4 in-block max only needs the
    # level-2 / level-2W stages (half the rolls of the generic 4-stage version).
    p4_down_up = _pair_max(_pair_max(q4, 2, m_col2), 2 * width, m_row2)
    q5 = w20 * v5 + w21 * p4_down_up                                  # == up4(P5_bu)

    # --- 1x1 conv as three accumulated dots (no 3C concat) + folded BN + SiLU --
    y = jnp.dot(wk3_ref[...], t3, preferred_element_type=f32)
    y = y + jnp.dot(wk4_ref[...], q4, preferred_element_type=f32)
    y = y + jnp.dot(wk5_ref[...], q5, preferred_element_type=f32)
    y = y + wb_ref[...]
    out_ref[...] = (y * jax.nn.sigmoid(y)).astype(out_ref.dtype)


def bifpn_pallas(p3, p4, p5, w1, w2, conv_w,
                 bn_gamma=None, bn_beta=None, bn_mean=None, bn_var=None,
                 *, row_tile=None, vmem_limit_bytes=48 * 1024 * 1024):
    N, C, H, W = p3.shape
    Cout = conv_w.shape[0]

    # The PyTorch forward only broadcasts correctly when P4 = P3/2 and P5 is
    # 1x1 spatially; make those assumptions explicit instead of silently wrong.
    if p4.shape != (N, C, H // 2, W // 2):
        raise ValueError(f"P4 must be P3/2: got {p4.shape}")
    if p5.shape != (N, C, 1, 1):
        raise ValueError(f"P5 must be 1x1 spatially: got {p5.shape}")
    if H % 4 or W % 4:
        raise ValueError("H and W must be multiples of 4 (2x2 / 4x4 pool groups)")
    if conv_w.shape != (Cout, 3 * C):
        raise ValueError(f"conv weight must be (Cout, 3C): got {conv_w.shape}")

    S, S4 = H * W, (H // 2) * (W // 2)

    # Spatial row tile: multiple of 4 P3 rows (pool groups stay inside a tile);
    # flattened tile widths (t*W and t*W/4) multiples of 128 lanes so DMA'd
    # blocks stay lane-aligned.  >=2 tiles keeps both v7x TCs busy even at N=1.
    def _valid(t):
        return H % t == 0 and t % 4 == 0 and (t == H or (t * W) % 512 == 0)

    if row_tile is None:
        row_tile = H
        for t in range(4, H, 4):
            if _valid(t) and t * W >= 512:
                row_tile = t
                break
    if not _valid(row_tile):
        row_tile = H
    num_row_tiles = H // row_tile
    s_tile = row_tile * W
    s4_tile = s_tile // 4

    # Fold eval-mode BatchNorm (general gamma/beta/running stats) into the conv.
    f32 = jnp.float32
    gamma = jnp.ones((Cout,), f32) if bn_gamma is None else bn_gamma.astype(f32)
    beta = jnp.zeros((Cout,), f32) if bn_beta is None else bn_beta.astype(f32)
    mean = jnp.zeros((Cout,), f32) if bn_mean is None else bn_mean.astype(f32)
    var = jnp.ones((Cout,), f32) if bn_var is None else bn_var.astype(f32)
    scale = gamma / jnp.sqrt(var + BN_EPS)
    wk = conv_w.astype(f32) * scale[:, None]
    wb = (beta - mean * scale)[:, None]
    wk3, wk4, wk5 = wk[:, :C], wk[:, C:2 * C], wk[:, 2 * C:]

    # Tiny trace-time constants shared by every grid step:
    #  * up   : (S4_tile, S_tile) 0/1 replication matrix for the in-kernel
    #           nearest-2x upsample of raw P4 (scales with tile size -> keep
    #           row tiles modest).
    #  * hmod4: per-fine-lane "row index mod 4" (hoisted pair-max mask source).
    hh = jnp.arange(row_tile, dtype=jnp.int32)
    ww = jnp.arange(W, dtype=jnp.int32)
    fine_to_coarse = ((hh[:, None] // 2) * (W // 2) + ww[None, :] // 2).reshape(1, s_tile)
    up = (fine_to_coarse == jnp.arange(s4_tile, dtype=jnp.int32)[:, None]).astype(f32)
    hmod4 = jnp.broadcast_to(hh[:, None] & 3, (row_tile, W)).reshape(1, s_tile)

    # Only free trailing-collapse reshapes here: no casts, no repeats.  The
    # kernel DMAs P3 / raw P4 / P5 in their native dtype (bf16 halves traffic).
    x3 = p3.reshape(N, C, S)
    x4 = p4.reshape(N, C, S4)
    x5 = p5.reshape(N, C, 1)

    kernel = functools.partial(_bifpn_kernel, width=W)
    grid_spec = pltpu.PrefetchScalarGridSpec(
        num_scalar_prefetch=0,
        grid=(N, num_row_tiles),
        in_specs=[
            pl.BlockSpec(memory_space=pltpu.MemorySpace.SMEM),           # w1 (2,)
            pl.BlockSpec(memory_space=pltpu.MemorySpace.SMEM),           # w2 (3,)
            pl.BlockSpec((Cout, C), lambda n, t: (0, 0)),                # wk3
            pl.BlockSpec((Cout, C), lambda n, t: (0, 0)),                # wk4
            pl.BlockSpec((Cout, C), lambda n, t: (0, 0)),                # wk5
            pl.BlockSpec((Cout, 1), lambda n, t: (0, 0)),                # folded BN bias
            pl.BlockSpec((s4_tile, s_tile), lambda n, t: (0, 0)),        # P4 upsample matrix
            pl.BlockSpec((1, s_tile), lambda n, t: (0, 0)),              # row mod 4 table
            pl.BlockSpec((None, C, s_tile), lambda n, t: (n, 0, t)),     # P3 tile
            pl.BlockSpec((None, C, s4_tile), lambda n, t: (n, 0, t)),    # raw P4 tile
            pl.BlockSpec((None, C, 1), lambda n, t: (n, 0, 0)),          # P5 (1x1)
        ],
        out_specs=pl.BlockSpec((None, Cout, s_tile), lambda n, t: (n, 0, t)),
    )
    out = pl.pallas_call(
        kernel,
        out_shape=jax.ShapeDtypeStruct((N, Cout, S), p3.dtype),
        grid_spec=grid_spec,
        compiler_params=pltpu.CompilerParams(
            dimension_semantics=("parallel", "parallel"),
            vmem_limit_bytes=vmem_limit_bytes),
    )(w1.astype(f32), w2.astype(f32), wk3, wk4, wk5, wb, up, hmod4, x3, x4, x5)
    return out.reshape(N, Cout, H, W)


def bifpn_reference(p3, p4, p5, w1, w2, conv_w):
    """Literal (plain-JAX, NCHW) transcription of the PyTorch forward."""
    r1 = jax.nn.relu(w1)
    w1n = r1 / (r1.sum() + EPS)
    r2 = jax.nn.relu(w2)
    w2n = r2 / (r2.sum() + EPS)
    N, C, H, W = p3.shape

    def up(x, f):
        return jnp.repeat(jnp.repeat(x, f, axis=2), f, axis=3)

    def pool2(x):
        n, c, h, w = x.shape
        return x.reshape(n, c, h // 2, 2, w // 2, 2).max(axis=(3, 5))

    p5_up = jnp.broadcast_to(p5, p4.shape)                      # nearest 1x1 -> P4
    p4_td = w1n[0] * p4 + w1n[1] * p5_up
    p4_up = up(p4_td, H // p4.shape[2])
    p3_td = w1n[0] * p3 + w1n[1] * p4_up
    p3_down = pool2(p3_td)
    p4_bu = w2n[0] * p4_td + w2n[1] * p3_down + w2n[2] * p5     # p5 broadcasts
    p4_down = pool2(p4_bu)
    p5_bu = w2n[0] * p5 + w2n[1] * p4_down + w2n[2] * 0.0       # p5 broadcasts
    fused = jnp.concatenate(
        [p3_td, up(p4_bu, H // p4_bu.shape[2]), up(p5_bu, H // p5_bu.shape[2])],
        axis=1)
    y = jnp.einsum('oc,nchw->nohw', conv_w, fused)              # 1x1 conv (no bias)
    y = y / jnp.sqrt(1.0 + BN_EPS)                              # eval-mode BN (default stats)
    return y * jax.nn.sigmoid(y)                                # SiLU


if __name__ == "__main__":
    key = jax.random.PRNGKey(0)
    k1, k2, k3, k4 = jax.random.split(key, 4)

    N, C, H, W = 2, 4, 32, 32
    Cout = 8
    # in_channels_list = [C, C, C] -> out_conv: 3C -> Cout, 1x1
    p3 = jax.random.normal(k1, (N, C, H, W), jnp.float32)
    p4 = jax.random.normal(k2, (N, C, H // 2, W // 2), jnp.float32)
    p5 = jax.random.normal(k3, (N, C, 1, 1), jnp.float32)

    # deterministic parameter init (module __init__: w1=ones(2), w2=ones(3))
    w1 = jnp.ones((2,), jnp.float32)
    w2 = jnp.ones((3,), jnp.float32)
    conv_w = 0.1 * jax.random.normal(k4, (Cout, 3 * C), jnp.float32)

    # f32 activations (tight check); auto tiling -> row_tile=16 -> grid (2, 2)
    out = jax.block_until_ready(bifpn_pallas(p3, p4, p5, w1, w2, conv_w))
    ref = bifpn_reference(p3, p4, p5, w1, w2, conv_w)
    assert out.shape == (N, Cout, H, W), out.shape
    assert jnp.allclose(out, ref, rtol=1e-4, atol=1e-4), \
        float(jnp.max(jnp.abs(out - ref)))

    # bf16 activations: kernel DMAs bf16, computes f32 in VMEM, stores bf16
    p3b, p4b, p5b = (x.astype(jnp.bfloat16) for x in (p3, p4, p5))
    out_bf = jax.block_until_ready(bifpn_pallas(p3b, p4b, p5b, w1, w2, conv_w))
    ref_bf = bifpn_reference(p3b.astype(jnp.float32), p4b.astype(jnp.float32),
                             p5b.astype(jnp.float32), w1, w2, conv_w)
    assert out_bf.dtype == jnp.bfloat16
    assert jnp.allclose(out_bf.astype(jnp.float32), ref_bf, rtol=3e-2, atol=3e-2), \
        float(jnp.max(jnp.abs(out_bf.astype(jnp.float32) - ref_bf)))

    print("KERNEL_OK")
</pallas_src>

<mosaic_0001>
module attributes {stable_mosaic.version = 11 : i64} {
  func.func @_bifpn_kernel(%arg0: i32, %arg1: i32, %arg2: memref<2xf32, #tpu.memory_space<smem>>, %arg3: memref<3xf32, #tpu.memory_space<smem>>, %arg4: memref<8x4xf32, #tpu.memory_space<vmem>>, %arg5: memref<8x4xf32, #tpu.memory_space<vmem>>, %arg6: memref<8x4xf32, #tpu.memory_space<vmem>>, %arg7: memref<8x1xf32, #tpu.memory_space<vmem>>, %arg8: memref<128x512xf32, #tpu.memory_space<vmem>>, %arg9: memref<1x512xi32, #tpu.memory_space<vmem>>, %arg10: memref<1x4x512xf32, #tpu.memory_space<vmem>>, %arg11: memref<1x4x128xf32, #tpu.memory_space<vmem>>, %arg12: memref<1x4x1xf32, #tpu.memory_space<vmem>>, %arg13: memref<1x8x512xf32, #tpu.memory_space<vmem>>) attributes {dimension_semantics = [#tpu.dimension_semantics<parallel>, #tpu.dimension_semantics<parallel>], iteration_bounds = array<i64: 2, 2>, scalar_prefetch = 0 : i64, scratch_operands = 0 : i64, tpu.core_type = #tpu.core_type<tc>, window_params = [{transform_indices = @transform_0, window_bounds = array<i64: 2>}, {transform_indices = @transform_1, window_bounds = array<i64: 3>}, {pipeline_mode = #tpu.pipeline_mode<synchronous>, transform_indices = @transform_2, window_bounds = array<i64: 8, 4>}, {pipeline_mode = #tpu.pipeline_mode<synchronous>, transform_indices = @transform_3, window_bounds = array<i64: 8, 4>}, {pipeline_mode = #tpu.pipeline_mode<synchronous>, transform_indices = @transform_4, window_bounds = array<i64: 8, 4>}, {pipeline_mode = #tpu.pipeline_mode<synchronous>, transform_indices = @transform_5, window_bounds = array<i64: 8, 1>}, {pipeline_mode = #tpu.pipeline_mode<synchronous>, transform_indices = @transform_6, window_bounds = array<i64: 128, 512>}, {pipeline_mode = #tpu.pipeline_mode<synchronous>, transform_indices = @transform_7, window_bounds = array<i64: 1, 512>}, {transform_indices = @transform_8, window_bounds = array<i64: 1, 4, 512>}, {transform_indices = @transform_9, window_bounds = array<i64: 1, 4, 128>}, {transform_indices = @transform_10, window_bounds = array<i64: 1, 4, 1>}, {transform_indices = @transform_11, window_bounds = array<i64: 1, 8, 512>}]} {
    %c0 = arith.constant 0 : index
    %0 = memref.load %arg2[%c0] : memref<2xf32, #tpu.memory_space<smem>>
    %cst = arith.constant 0.000000e+00 : f32
    %1 = arith.maximumf %0, %cst : f32
    %c1 = arith.constant 1 : index
    %2 = memref.load %arg2[%c1] : memref<2xf32, #tpu.memory_space<smem>>
    %cst_0 = arith.constant 0.000000e+00 : f32
    %3 = arith.maximumf %2, %cst_0 : f32
    %4 = arith.addf %1, %3 : f32
    %cst_1 = arith.constant 9.99999974E-5 : f32
    %5 = arith.addf %4, %cst_1 : f32
    %6 = arith.divf %1, %5 : f32
    %7 = arith.divf %3, %5 : f32
    %c0_2 = arith.constant 0 : index
    %8 = memref.load %arg3[%c0_2] : memref<3xf32, #tpu.memory_space<smem>>
    %cst_3 = arith.constant 0.000000e+00 : f32
    %9 = arith.maximumf %8, %cst_3 : f32
    %c1_4 = arith.constant 1 : index
    %10 = memref.load %arg3[%c1_4] : memref<3xf32, #tpu.memory_space<smem>>
    %cst_5 = arith.constant 0.000000e+00 : f32
    %11 = arith.maximumf %10, %cst_5 : f32
    %c2 = arith.constant 2 : index
    %12 = memref.load %arg3[%c2] : memref<3xf32, #tpu.memory_space<smem>>
    %cst_6 = arith.constant 0.000000e+00 : f32
    %13 = arith.maximumf %12, %cst_6 : f32
    %14 = arith.addf %9, %11 : f32
    %15 = arith.addf %14, %13 : f32
    %cst_7 = arith.constant 9.99999974E-5 : f32
    %16 = arith.addf %15, %cst_7 : f32
    %17 = arith.divf %9, %16 : f32
    %18 = arith.divf %11, %16 : f32
    %19 = arith.divf %13, %16 : f32
    %c0_8 = arith.constant 0 : index
    %c0_9 = arith.constant 0 : index
    %c0_10 = arith.constant 0 : index
    %20 = vector.load %arg10[%c0_8, %c0_9, %c0_10] : memref<1x4x512xf32, #tpu.memory_space<vmem>>, vector<1x4x512xf32>
    %21 = vector.shape_cast %20 : vector<1x4x512xf32> to vector<4x512xf32>
    %c0_11 = arith.constant 0 : index
    %c0_12 = arith.constant 0 : index
    %c0_13 = arith.constant 0 : index
    %22 = vector.load %arg11[%c0_11, %c0_12, %c0_13] : memref<1x4x128xf32, #tpu.memory_space<vmem>>, vector<1x4x128xf32>
    %23 = vector.shape_cast %22 : vector<1x4x128xf32> to vector<4x128xf32>
    %c0_14 = arith.constant 0 : index
    %c0_15 = arith.constant 0 : index
    %c0_16 = arith.constant 0 : index
    %24 = vector.load %arg12[%c0_14, %c0_15, %c0_16] : memref<1x4x1xf32, #tpu.memory_space<vmem>>, vector<1x4x1xf32>
    %25 = vector.shape_cast %24 : vector<1x4x1xf32> to vector<4x1xf32>
    %26 = vector.shape_cast %25 : vector<4x1xf32> to vector<4x1xf32>
    %27 = vector.broadcast %26 : vector<4x1xf32> to vector<4x512xf32>
    %28 = tpu.iota {dimensions = array<i32: 1>} : vector<1x512xi32>
    %c0_17 = arith.constant 0 : index
    %c0_18 = arith.constant 0 : index
    %29 = vector.load %arg9[%c0_17, %c0_18] : memref<1x512xi32, #tpu.memory_space<vmem>>, vector<1x512xi32>
    %c1_i32 = arith.constant 1 : i32
    %30 = vector.broadcast %c1_i32 : i32 to vector<1x512xi32>
    %31 = arith.andi %28, %30 : vector<1x512xi32>
    %c0_i32 = arith.constant 0 : i32
    %32 = vector.broadcast %c0_i32 : i32 to vector<1x512xi32>
    %33 = arith.cmpi eq, %31, %32 : vector<1x512xi32>
    %c2_i32 = arith.constant 2 : i32
    %34 = vector.broadcast %c2_i32 : i32 to vector<1x512xi32>
    %35 = arith.andi %28, %34 : vector<1x512xi32>
    %c0_i32_19 = arith.constant 0 : i32
    %36 = vector.broadcast %c0_i32_19 : i32 to vector<1x512xi32>
    %37 = arith.cmpi eq, %35, %36 : vector<1x512xi32>
    %c1_i32_20 = arith.constant 1 : i32
    %38 = vector.broadcast %c1_i32_20 : i32 to vector<1x512xi32>
    %39 = arith.andi %29, %38 : vector<1x512xi32>
    %c0_i32_21 = arith.constant 0 : i32
    %40 = vector.broadcast %c0_i32_21 : i32 to vector<1x512xi32>
    %41 = arith.cmpi eq, %39, %40 : vector<1x512xi32>
    %c2_i32_22 = arith.constant 2 : i32
    %42 = vector.broadcast %c2_i32_22 : i32 to vector<1x512xi32>
    %43 = arith.andi %29, %42 : vector<1x512xi32>
    %c0_i32_23 = arith.constant 0 : i32
    %44 = vector.broadcast %c0_i32_23 : i32 to vector<1x512xi32>
    %45 = arith.cmpi eq, %43, %44 : vector<1x512xi32>
    %c0_24 = arith.constant 0 : index
    %c0_25 = arith.constant 0 : index
    %46 = vector.load %arg8[%c0_24, %c0_25] : memref<128x512xf32, #tpu.memory_space<vmem>>, vector<128x512xf32>
    %cst_26 = arith.constant dense<0.000000e+00> : vector<4x512xf32>
    %47 = tpu.matmul %23, %46, %cst_26 {dimension_numbers = #tpu.dot_dimension_numbers<[1], [0], [0], [1], [0, 0, 1, 1], [], []>} : vector<4x128xf32>, vector<128x512xf32>, vector<4x512xf32> -> vector<4x512xf32>
    %48 = vector.broadcast %6 : f32 to vector<4x512xf32>
    %49 = arith.mulf %48, %47 : vector<4x512xf32>
    %50 = vector.broadcast %7 : f32 to vector<4x512xf32>
    %51 = arith.mulf %50, %27 : vector<4x512xf32>
    %52 = arith.addf %49, %51 : vector<4x512xf32>
    %53 = vector.broadcast %6 : f32 to vector<4x512xf32>
    %54 = arith.mulf %53, %21 : vector<4x512xf32>
    %55 = vector.broadcast %7 : f32 to vector<4x512xf32>
    %56 = arith.mulf %55, %52 : vector<4x512xf32>
    %57 = arith.addf %54, %56 : vector<4x512xf32>
    %58 = vector.extract_strided_slice %57 {offsets = [0, 1], sizes = [4, 511], strides = [1, 1]} : vector<4x512xf32> to vector<4x511xf32>
    %59 = vector.extract_strided_slice %57 {offsets = [0, 0], sizes = [4, 1], strides = [1, 1]} : vector<4x512xf32> to vector<4x1xf32>
    %60 = tpu.concatenate %58, %59 in 1 : vector<4x511xf32>, vector<4x1xf32> -> vector<4x512xf32>
    %61 = vector.extract_strided_slice %57 {offsets = [0, 511], sizes = [4, 1], strides = [1, 1]} : vector<4x512xf32> to vector<4x1xf32>
    %62 = vector.extract_strided_slice %57 {offsets = [0, 0], sizes = [4, 511], strides = [1, 1]} : vector<4x512xf32> to vector<4x511xf32>
    %63 = tpu.concatenate %61, %62 in 1 : vector<4x1xf32>, vector<4x511xf32> -> vector<4x512xf32>
    %64 = vector.shape_cast %33 : vector<1x512xi1> to vector<1x512xi1>
    %65 = vector.broadcast %64 : vector<1x512xi1> to vector<4x512xi1>
    %66 = arith.select %65, %60, %63 : vector<4x512xi1>, vector<4x512xf32>
    %67 = arith.maximumf %57, %66 : vector<4x512xf32>
    %68 = vector.extract_strided_slice %67 {offsets = [0, 32], sizes = [4, 480], strides = [1, 1]} : vector<4x512xf32> to vector<4x480xf32>
    %69 = vector.extract_strided_slice %67 {offsets = [0, 0], sizes = [4, 32], strides = [1, 1]} : vector<4x512xf32> to vector<4x32xf32>
    %70 = tpu.concatenate %68, %69 in 1 : vector<4x480xf32>, vector<4x32xf32> -> vector<4x512xf32>
    %71 = vector.extract_strided_slice %67 {offsets = [0, 480], sizes = [4, 32], strides = [1, 1]} : vector<4x512xf32> to vector<4x32xf32>
    %72 = vector.extract_strided_slice %67 {offsets = [0, 0], sizes = [4, 480], strides = [1, 1]} : vector<4x512xf32> to vector<4x480xf32>
    %73 = tpu.concatenate %71, %72 in 1 : vector<4x32xf32>, vector<4x480xf32> -> vector<4x512xf32>
    %74 = vector.shape_cast %41 : vector<1x512xi1> to vector<1x512xi1>
    %75 = vector.broadcast %74 : vector<1x512xi1> to vector<4x512xi1>
    %76 = arith.select %75, %70, %73 : vector<4x512xi1>, vector<4x512xf32>
    %77 = arith.maximumf %67, %76 : vector<4x512xf32>
    %78 = vector.broadcast %17 : f32 to vector<4x512xf32>
    %79 = arith.mulf %78, %52 : vector<4x512xf32>
    %80 = vector.broadcast %18 : f32 to vector<4x512xf32>
    %81 = arith.mulf %80, %77 : vector<4x512xf32>
    %82 = arith.addf %79, %81 : vector<4x512xf32>
    %83 = vector.broadcast %19 : f32 to vector<4x512xf32>
    %84 = arith.mulf %83, %27 : vector<4x512xf32>
    %85 = arith.addf %82, %84 : vector<4x512xf32>
    %86 = vector.extract_strided_slice %85 {offsets = [0, 2], sizes = [4, 510], strides = [1, 1]} : vector<4x512xf32> to vector<4x510xf32>
    %87 = vector.extract_strided_slice %85 {offsets = [0, 0], sizes = [4, 2], strides = [1, 1]} : vector<4x512xf32> to vector<4x2xf32>
    %88 = tpu.concatenate %86, %87 in 1 : vector<4x510xf32>, vector<4x2xf32> -> vector<4x512xf32>
    %89 = vector.extract_strided_slice %85 {offsets = [0, 510], sizes = [4, 2], strides = [1, 1]} : vector<4x512xf32> to vector<4x2xf32>
    %90 = vector.extract_strided_slice %85 {offsets = [0, 0], sizes = [4, 510], strides = [1, 1]} : vector<4x512xf32> to vector<4x510xf32>
    %91 = tpu.concatenate %89, %90 in 1 : vector<4x2xf32>, vector<4x510xf32> -> vector<4x512xf32>
    %92 = vector.shape_cast %37 : vector<1x512xi1> to vector<1x512xi1>
    %93 = vector.broadcast %92 : vector<1x512xi1> to vector<4x512xi1>
    %94 = arith.select %93, %88, %91 : vector<4x512xi1>, vector<4x512xf32>
    %95 = arith.maximumf %85, %94 : vector<4x512xf32>
    %96 = vector.extract_strided_slice %95 {offsets = [0, 64], sizes = [4, 448], strides = [1, 1]} : vector<4x512xf32> to vector<4x448xf32>
    %97 = vector.extract_strided_slice %95 {offsets = [0, 0], sizes = [4, 64], strides = [1, 1]} : vector<4x512xf32> to vector<4x64xf32>
    %98 = tpu.concatenate %96, %97 in 1 : vector<4x448xf32>, vector<4x64xf32> -> vector<4x512xf32>
    %99 = vector.extract_strided_slice %95 {offsets = [0, 448], sizes = [4, 64], strides = [1, 1]} : vector<4x512xf32> to vector<4x64xf32>
    %100 = vector.extract_strided_slice %95 {offsets = [0, 0], sizes = [4, 448], strides = [1, 1]} : vector<4x512xf32> to vector<4x448xf32>
    %101 = tpu.concatenate %99, %100 in 1 : vector<4x64xf32>, vector<4x448xf32> -> vector<4x512xf32>
    %102 = vector.shape_cast %45 : vector<1x512xi1> to vector<1x512xi1>
    %103 = vector.broadcast %102 : vector<1x512xi1> to vector<4x512xi1>
    %104 = arith.select %103, %98, %101 : vector<4x512xi1>, vector<4x512xf32>
    %105 = arith.maximumf %95, %104 : vector<4x512xf32>
    %106 = vector.broadcast %17 : f32 to vector<4x512xf32>
    %107 = arith.mulf %106, %27 : vector<4x512xf32>
    %108 = vector.broadcast %18 : f32 to vector<4x512xf32>
    %109 = arith.mulf %108, %105 : vector<4x512xf32>
    %110 = arith.addf %107, %109 : vector<4x512xf32>
    %c0_27 = arith.constant 0 : index
    %c0_28 = arith.constant 0 : index
    %111 = vector.load %arg4[%c0_27, %c0_28] : memref<8x4xf32, #tpu.memory_space<vmem>>, vector<8x4xf32>
    %cst_29 = arith.constant dense<0.000000e+00> : vector<8x512xf32>
    %112 = tpu.matmul %111, %57, %cst_29 {dimension_numbers = #tpu.dot_dimension_numbers<[1], [0], [0], [1], [0, 0, 1, 1], [], []>} : vector<8x4xf32>, vector<4x512xf32>, vector<8x512xf32> -> vector<8x512xf32>
    %c0_30 = arith.constant 0 : index
    %c0_31 = arith.constant 0 : index
    %113 = vector.load %arg5[%c0_30, %c0_31] : memref<8x4xf32, #tpu.memory_space<vmem>>, vector<8x4xf32>
    %cst_32 = arith.constant dense<0.000000e+00> : vector<8x512xf32>
    %114 = tpu.matmul %113, %85, %cst_32 {dimension_numbers = #tpu.dot_dimension_numbers<[1], [0], [0], [1], [0, 0, 1, 1], [], []>} : vector<8x4xf32>, vector<4x512xf32>, vector<8x512xf32> -> vector<8x512xf32>
    %115 = arith.addf %112, %114 : vector<8x512xf32>
    %c0_33 = arith.constant 0 : index
    %c0_34 = arith.constant 0 : index
    %116 = vector.load %arg6[%c0_33, %c0_34] : memref<8x4xf32, #tpu.memory_space<vmem>>, vector<8x4xf32>
    %cst_35 = arith.constant dense<0.000000e+00> : vector<8x512xf32>
    %117 = tpu.matmul %116, %110, %cst_35 {dimension_numbers = #tpu.dot_dimension_numbers<[1], [0], [0], [1], [0, 0, 1, 1], [], []>} : vector<8x4xf32>, vector<4x512xf32>, vector<8x512xf32> -> vector<8x512xf32>
    %118 = arith.addf %115, %117 : vector<8x512xf32>
    %c0_36 = arith.constant 0 : index
    %c0_37 = arith.constant 0 : index
    %119 = vector.load %arg7[%c0_36, %c0_37] : memref<8x1xf32, #tpu.memory_space<vmem>>, vector<8x1xf32>
    %120 = vector.broadcast %119 : vector<8x1xf32> to vector<8x512xf32>
    %121 = arith.addf %118, %120 : vector<8x512xf32>
    %122 = arith.negf %121 : vector<8x512xf32>
    %123 = math.exp %122 : vector<8x512xf32>
    %cst_38 = arith.constant 1.000000e+00 : f32
    %124 = vector.broadcast %cst_38 : f32 to vector<8x512xf32>
    %125 = arith.addf %124, %123 : vector<8x512xf32>
    %126 = arith.divf %124, %125 : vector<8x512xf32>
    %127 = arith.mulf %121, %126 : vector<8x512xf32>
    %c0_39 = arith.constant 0 : index
    %c0_40 = arith.constant 0 : index
    %c0_41 = arith.constant 0 : index
    %128 = vector.load %arg13[%c0_39, %c0_40, %c0_41] : memref<1x8x512xf32, #tpu.memory_space<vmem>>, vector<1x8x512xf32>
    %129 = vector.shape_cast %128 : vector<1x8x512xf32> to vector<8x512xf32>
    %130 = vector.shape_cast %127 : vector<8x512xf32> to vector<1x8x512xf32>
    tpu.vector_store %arg13[%c0_39, %c0_40, %c0_41], %130 {strides = array<i32>} : memref<1x8x512xf32, #tpu.memory_space<vmem>>, vector<1x8x512xf32>,
    return
  }
  func.func @transform_0(%arg0: i32, %arg1: i32) -> i32 {
    %c0_i32 = arith.constant 0 : i32
    %c0_i32_0 = arith.constant 0 : i32
    return %c0_i32 : i32
  }
  func.func @transform_1(%arg0: i32, %arg1: i32) -> i32 {
    %c0_i32 = arith.constant 0 : i32
    %c0_i32_0 = arith.constant 0 : i32
    return %c0_i32 : i32
  }
  func.func @transform_2(%arg0: i32, %arg1: i32) -> (i32, i32) {
    %c0_i32 = arith.constant 0 : i32
    %c0_i32_0 = arith.constant 0 : i32
    %c0_i32_1 = arith.constant 0 : i32
    return %c0_i32, %c0_i32_0 : i32, i32
  }
  func.func @transform_3(%arg0: i32, %arg1: i32) -> (i32, i32) {
    %c0_i32 = arith.constant 0 : i32
    %c0_i32_0 = arith.constant 0 : i32
    %c0_i32_1 = arith.constant 0 : i32
    return %c0_i32, %c0_i32_0 : i32, i32
  }
  func.func @transform_4(%arg0: i32, %arg1: i32) -> (i32, i32) {
    %c0_i32 = arith.constant 0 : i32
    %c0_i32_0 = arith.constant 0 : i32
    %c0_i32_1 = arith.constant 0 : i32
    return %c0_i32, %c0_i32_0 : i32, i32
  }
  func.func @transform_5(%arg0: i32, %arg1: i32) -> (i32, i32) {
    %c0_i32 = arith.constant 0 : i32
    %c0_i32_0 = arith.constant 0 : i32
    %c0_i32_1 = arith.constant 0 : i32
    return %c0_i32, %c0_i32_0 : i32, i32
  }
  func.func @transform_6(%arg0: i32, %arg1: i32) -> (i32, i32) {
    %c0_i32 = arith.constant 0 : i32
    %c0_i32_0 = arith.constant 0 : i32
    %c0_i32_1 = arith.constant 0 : i32
    return %c0_i32, %c0_i32_0 : i32, i32
  }
  func.func @transform_7(%arg0: i32, %arg1: i32) -> (i32, i32) {
    %c0_i32 = arith.constant 0 : i32
    %c0_i32_0 = arith.constant 0 : i32
    %c0_i32_1 = arith.constant 0 : i32
    return %c0_i32, %c0_i32_0 : i32, i32
  }
  func.func @transform_8(%arg0: i32, %arg1: i32) -> (i32, i32, i32) {
    %c0_i32 = arith.constant 0 : i32
    %c0_i32_0 = arith.constant 0 : i32
    return %arg0, %c0_i32, %arg1 : i32, i32, i32
  }
  func.func @transform_9(%arg0: i32, %arg1: i32) -> (i32, i32, i32) {
    %c0_i32 = arith.constant 0 : i32
    %c0_i32_0 = arith.constant 0 : i32
    return %arg0, %c0_i32, %arg1 : i32, i32, i32
  }
  func.func @transform_10(%arg0: i32, %arg1: i32) -> (i32, i32, i32) {
    %c0_i32 = arith.constant 0 : i32
    %c0_i32_0 = arith.constant 0 : i32
    %c0_i32_1 = arith.constant 0 : i32
    return %arg0, %c0_i32, %c0_i32_0 : i32, i32, i32
  }
  func.func @transform_11(%arg0: i32, %arg1: i32) -> (i32, i32, i32) {
    %c0_i32 = arith.constant 0 : i32
    %c0_i32_0 = arith.constant 0 : i32
    return %arg0, %c0_i32, %arg1 : i32, i32, i32
  }
}

</mosaic_0001>

<llo_original>
// kernel: tpu_custom_call.1
$region0: #{tpu_custom_call.1}
  #allocation0 [shape = 'u32[]', space=smem, size = 0x4, offset = 0x4, fixed_abs, tag = 'smem constant byte address 0x4 - core index']
  #allocation1 [shape = 'u32[72,128]{1,0:T(1,128)}', space=vmem, size = 0x9000, scoped, tag = 'internal scratch']
  %s0 = inlined_call_operand.vmem [shape: f32[2], index: 0, kind: input, shape index: {}]
  %s1 = inlined_call_operand.vmem [shape: f32[3], index: 1, kind: input, shape index: {}]
  %s2 = inlined_call_operand.vmem [shape: f32[8,4], index: 2, kind: input, shape index: {}]
  %s3 = inlined_call_operand.vmem [shape: f32[8,4], index: 3, kind: input, shape index: {}]
  %s4 = inlined_call_operand.vmem [shape: f32[8,4], index: 4, kind: input, shape index: {}]
  %s5 = inlined_call_operand.vmem [shape: f32[8,1], index: 5, kind: input, shape index: {}]
  %s6 = inlined_call_operand.hbm [shape: f32[128,512], index: 6, kind: input, shape index: {}]
  %s7 = inlined_call_operand.vmem [shape: s32[1,512], index: 7, kind: input, shape index: {}]
  %s8 = inlined_call_operand.hbm [shape: f32[2,4,1024], index: 8, kind: input, shape index: {}]
  %s9 = inlined_call_operand.vmem [shape: f32[2,4,256], index: 9, kind: input, shape index: {}]
  %s10 = inlined_call_operand.vmem [shape: f32[2,4,1], index: 10, kind: input, shape index: {}]
  %s11 = inlined_call_operand.hbm [shape: f32[2,8,1024], index: 11, kind: output, shape index: {}]
  %s12 = sld [smem:[#allocation0]]
  $region93: #{tpu_custom_call.1} parent=0
    _
  %s14 = ssub.s32 1, %s12
  %s15 = scalar_select 0, %s14, %s12
  $region1: #{tpu_custom_call.1} parent=0
    #allocation2 [shape = 'u8[512]{0}', space=smem, size = 0x200, scoped, tag = 'input window, operand 0, single buffered']
    #allocation3 [shape = 's32[2]{0}', space=sflag, size = 0x8, scoped, tag = 'scoped memory for tpu_custom_call.1']
    #allocation4 [shape = 's32[2]{0}', space=sflag, size = 0x8, scoped, tag = 'scoped memory for tpu_custom_call.1']
    #allocation5 [shape = 's32[2]{0}', space=sflag, size = 0x8, scoped, tag = 'scoped memory for tpu_custom_call.1']
    #allocation6 [shape = 'u8[512]{0}', space=smem, size = 0x200, scoped, tag = 'input window, operand 1, single buffered']
    #allocation7 [shape = 's32[1]{0}', space=sflag, size = 0x4, scoped, tag = 'scoped memory for tpu_custom_call.1']
    #allocation8 [shape = 'u8[262144]{0}', space=vmem, size = 0x40000, scoped, tag = 'input window, operand 6, single buffered']
    #allocation9 [shape = 'u8[16384]{0}', space=vmem, size = 0x4000, scoped, tag = 'input window, operand 8']
    #allocation10 [shape = 's32[2]{0}', space=sflag, size = 0x8, scoped, tag = 'scoped memory for tpu_custom_call.1']
    #allocation11 [shape = 'u8[32768]{0}', space=vmem, size = 0x8000, scoped, tag = 'output window, operand 0']
    %16 = vsyncpa [#allocation5], 0
    %17 = vsyncpa [#allocation7], 0
    %18 = vsyncpa [#allocation3], 0
    %19 = vsyncpa [#allocation10], 0
    %s20 = scalar_lea.sflag [#allocation10], 1
    %21 = vsyncpa %s20, 0
    %22 = vsyncpa [#allocation4], 0
    %s23 = scalar_lea.sflag [#allocation4], 1
    %24 = vsyncpa %s23, 0
    loop: start=0, step=1, limit=6
    $region2: #{tpu_custom_call.1} parent=1 // loop_pre_header
      _
    $region3: #{tpu_custom_call.1} parent=1 // loop_header
      %s26 = sphi 0, %s30
      %p27 = scmp.ge.s32.totalorder %s26, 6
      %s33 = sphi 0, %s45
      %s34 = sphi 0, %s41
      %s35 = sphi 0, %s33
      %s36 = sphi 0, %s34
      %s37 = sphi 0, %s35
      %s38 = sphi 0, %s36
      %s46 = sphi 0, %s46
      %s48 = sphi 0, %s46
      %s49 = sphi 0, %s48
      %s63 = sphi 0, %s49
      %s67 = sphi 0, %s67
      %s69 = sphi 0, %s67
      %s70 = sphi 0, %s69
      %s84 = sphi 0, %s70
      %s88 = sphi 0, %s88
      %s90 = sphi 0, %s88
      %s91 = sphi 0, %s90
      %s105 = sphi 0, %s91
      %s109 = sphi 0, %s109
      %s111 = sphi 0, %s109
      %s112 = sphi 0, %s111
      %s126 = sphi 0, %s112
      %s130 = sphi 0, %s130
      %s132 = sphi 0, %s130
      %s133 = sphi 0, %s132
      %s147 = sphi 0, %s133
      %s151 = sphi 0, %s151
      %s153 = sphi 0, %s151
      %s154 = sphi 0, %s153
      %s168 = sphi 0, %s154
      %s172 = sphi 0, %s172
      %s174 = sphi 0, %s172
      %s175 = sphi 0, %s174
      %s189 = sphi 0, %s175
      %s193 = sphi 0, %s193
      %s195 = sphi 0, %s193
      %s196 = sphi 0, %s195
      %s210 = sphi 0, %s196
      %s218 = sphi 0, %s220
      %s221 = sphi 0, %s218
      %s222 = sphi 0, %s221
      %s238 = sphi 0, %s222
      %s246 = sphi 0, %s248
      %s249 = sphi 0, %s246
      %s250 = sphi 0, %s249
      %s266 = sphi 0, %s250
      %s272 = sphi 0, %s274
      %s275 = sphi 0, %s272
      %s276 = sphi 0, %s275
      %s292 = sphi 0, %s276
      %s300 = sphi 0, %s302
      %s303 = sphi 0, %s300
      %s304 = sphi 0, %s303
      %s320 = sphi 0, %s304
    $region4: #{tpu_custom_call.1} parent=1 // loop_header_branch
      %29 = sbr.rel (%p27) target = $region8
    $region5: #{tpu_custom_call.1} parent=1 // loop_body
      %s31 = ssub.s32 %s26, 1
      %s32 = ssub.s32 %s26, 2
      %s39 = sadd.s32 1, %s34
      %p40 = scmp.ge.s32.totalorder %s39, 2
      %s41 = scalar_select %p40, 0, %s39
      %s42 = sadd.s32 1, %s33
      %s43 = scalar_select %p40, %s42, %s33
      %p44 = scmp.ge.s32.totalorder %s43, 2
      %s45 = scalar_select %p44, 0, %s43
      %s47 = sadd.s32 %s46, 1
      %p50 = scmp.eq.s32.totalorder %s26, 3
      %p51 = scmp.ne.s32.totalorder %s46, %s48
      %p52 = scmp.eq.s32.totalorder %s26, 0
      %p53 = por %p51, %p52
      %p54 = scmp.ne.s32.totalorder %s46, %s48
      %p55 = scmp.eq.s32.totalorder %s31, 3
      %p56 = por %p54, %p55
      %p57 = scmp.ne.s32.totalorder %s48, %s49
      %p58 = scmp.eq.s32.totalorder %s31, 0
      %p59 = por %p57, %p58
      %p60 = scmp.ne.s32.totalorder %s48, %s49
      %p61 = scmp.eq.s32.totalorder %s32, 3
      %p62 = por %p60, %p61
      %p64 = scmp.ne.s32.totalorder %s49, %s63
      %p65 = scmp.eq.s32.totalorder %s32, 0
      %p66 = por %p64, %p65
      %s68 = sadd.s32 %s67, 1
      %p71 = scmp.eq.s32.totalorder %s26, 3
      %p72 = scmp.ne.s32.totalorder %s67, %s69
      %p73 = scmp.eq.s32.totalorder %s26, 0
      %p74 = por %p72, %p73
      %p75 = scmp.ne.s32.totalorder %s67, %s69
      %p76 = scmp.eq.s32.totalorder %s31, 3
      %p77 = por %p75, %p76
      %p78 = scmp.ne.s32.totalorder %s69, %s70
      %p79 = scmp.eq.s32.totalorder %s31, 0
      %p80 = por %p78, %p79
      %p81 = scmp.ne.s32.totalorder %s69, %s70
      %p82 = scmp.eq.s32.totalorder %s32, 3
      %p83 = por %p81, %p82
      %p85 = scmp.ne.s32.totalorder %s70, %s84
      %p86 = scmp.eq.s32.totalorder %s32, 0
      %p87 = por %p85, %p86
      %s89 = sadd.s32 %s88, 1
      %p92 = scmp.eq.s32.totalorder %s26, 3
      %p93 = scmp.ne.s32.totalorder %s88, %s90
      %p94 = scmp.eq.s32.totalorder %s26, 0
      %p95 = por %p93, %p94
      %p96 = scmp.ne.s32.totalorder %s88, %s90
      %p97 = scmp.eq.s32.totalorder %s31, 3
      %p98 = por %p96, %p97
      %p99 = scmp.ne.s32.totalorder %s90, %s91
      %p100 = scmp.eq.s32.totalorder %s31, 0
      %p101 = por %p99, %p100
      %p102 = scmp.ne.s32.totalorder %s90, %s91
      %p103 = scmp.eq.s32.totalorder %s32, 3
      %p104 = por %p102, %p103
      %p106 = scmp.ne.s32.totalorder %s91, %s105
      %p107 = scmp.eq.s32.totalorder %s32, 0
      %p108 = por %p106, %p107
      %s110 = sadd.s32 %s109, 1
      %p113 = scmp.eq.s32.totalorder %s26, 3
      %p114 = scmp.ne.s32.totalorder %s109, %s111
      %p115 = scmp.eq.s32.totalorder %s26, 0
      %p116 = por %p114, %p115
      %p117 = scmp.ne.s32.totalorder %s109, %s111
      %p118 = scmp.eq.s32.totalorder %s31, 3
      %p119 = por %p117, %p118
      %p120 = scmp.ne.s32.totalorder %s111, %s112
      %p121 = scmp.eq.s32.totalorder %s31, 0
      %p122 = por %p120, %p121
      %p123 = scmp.ne.s32.totalorder %s111, %s112
      %p124 = scmp.eq.s32.totalorder %s32, 3
      %p125 = por %p123, %p124
      %p127 = scmp.ne.s32.totalorder %s112, %s126
      %p128 = scmp.eq.s32.totalorder %s32, 0
      %p129 = por %p127, %p128
      %s131 = sadd.s32 %s130, 1
      %p134 = scmp.eq.s32.totalorder %s26, 3
      %p135 = scmp.ne.s32.totalorder %s130, %s132
      %p136 = scmp.eq.s32.totalorder %s26, 0
      %p137 = por %p135, %p136
      %p138 = scmp.ne.s32.totalorder %s130, %s132
      %p139 = scmp.eq.s32.totalorder %s31, 3
      %p140 = por %p138, %p139
      %p141 = scmp.ne.s32.totalorder %s132, %s133
      %p142 = scmp.eq.s32.totalorder %s31, 0
      %p143 = por %p141, %p142
      %p144 = scmp.ne.s32.totalorder %s132, %s133
      %p145 = scmp.eq.s32.totalorder %s32, 3
      %p146 = por %p144, %p145
      %p148 = scmp.ne.s32.totalorder %s133, %s147
      %p149 = scmp.eq.s32.totalorder %s32, 0
      %p150 = por %p148, %p149
      %s152 = sadd.s32 %s151, 1
      %p155 = scmp.eq.s32.totalorder %s26, 3
      %p156 = scmp.ne.s32.totalorder %s151, %s153
      %p157 = scmp.eq.s32.totalorder %s26, 0
      %p158 = por %p156, %p157
      %p159 = scmp.ne.s32.totalorder %s151, %s153
      %p160 = scmp.eq.s32.totalorder %s31, 3
      %p161 = por %p159, %p160
      %p162 = scmp.ne.s32.totalorder %s153, %s154
      %p163 = scmp.eq.s32.totalorder %s31, 0
      %p164 = por %p162, %p163
      %p165 = scmp.ne.s32.totalorder %s153, %s154
      %p166 = scmp.eq.s32.totalorder %s32, 3
      %p167 = por %p165, %p166
      %p169 = scmp.ne.s32.totalorder %s154, %s168
      %p170 = scmp.eq.s32.totalorder %s32, 0
      %p171 = por %p169, %p170
      %s173 = sadd.s32 %s172, 1
      %p176 = scmp.eq.s32.totalorder %s26, 3
      %p177 = scmp.ne.s32.totalorder %s172, %s174
      %p178 = scmp.eq.s32.totalorder %s26, 0
      %p179 = por %p177, %p178
      %p180 = scmp.ne.s32.totalorder %s172, %s174
      %p181 = scmp.eq.s32.totalorder %s31, 3
      %p182 = por %p180, %p181
      %p183 = scmp.ne.s32.totalorder %s174, %s175
      %p184 = scmp.eq.s32.totalorder %s31, 0
      %p185 = por %p183, %p184
      %p186 = scmp.ne.s32.totalorder %s174, %s175
      %p187 = scmp.eq.s32.totalorder %s32, 3
      %p188 = por %p186, %p187
      %p190 = scmp.ne.s32.totalorder %s175, %s189
      %p191 = scmp.eq.s32.totalorder %s32, 0
      %p192 = por %p190, %p191
      %s194 = sadd.s32 %s193, 1
      %p197 = scmp.eq.s32.totalorder %s26, 3
      %p198 = scmp.ne.s32.totalorder %s193, %s195
      %p199 = scmp.eq.s32.totalorder %s26, 0
      %p200 = por %p198, %p199
      %p201 = scmp.ne.s32.totalorder %s193, %s195
      %p202 = scmp.eq.s32.totalorder %s31, 3
      %p203 = por %p201, %p202
      %p204 = scmp.ne.s32.totalorder %s195, %s196
      %p205 = scmp.eq.s32.totalorder %s31, 0
      %p206 = por %p204, %p205
      %p207 = scmp.ne.s32.totalorder %s195, %s196
      %p208 = scmp.eq.s32.totalorder %s32, 3
      %p209 = por %p207, %p208
      %p211 = scmp.ne.s32.totalorder %s196, %s210
      %p212 = scmp.eq.s32.totalorder %s32, 0
      %p213 = por %p211, %p212
      %s214 = ssub.s32 %s33, %s45
      %s215 = ssub.s32 %s34, %s41
      %s216 = sor.u32 %s214, %s215
      %p217 = scmp.eq.s32.totalorder %s216, 0
      %s219 = sadd.s32 %s218, 1
      %s220 = scalar_select %p217, %s218, %s219
      %p223 = pneg %p217
      %p224 = scmp.eq.s32.totalorder %s26, 3
      %p225 = por %p223, %p224
      %p226 = scmp.ne.s32.totalorder %s218, %s221
      %p227 = scmp.eq.s32.totalorder %s26, 0
      %p228 = por %p226, %p227
      %p229 = scmp.ne.s32.totalorder %s218, %s221
      %p230 = scmp.eq.s32.totalorder %s31, 3
      %p231 = por %p229, %p230
      %p232 = scmp.ne.s32.totalorder %s221, %s222
      %p233 = scmp.eq.s32.totalorder %s31, 0
      %p234 = por %p232, %p233
      %p235 = scmp.ne.s32.totalorder %s221, %s222
      %p236 = scmp.eq.s32.totalorder %s32, 3
      %p237 = por %p235, %p236
      %p239 = scmp.ne.s32.totalorder %s222, %s238
      %p240 = scmp.eq.s32.totalorder %s32, 0
      %p241 = por %p239, %p240
      %s242 = ssub.s32 %s33, %s45
      %s243 = ssub.s32 %s34, %s41
      %s244 = sor.u32 %s242, %s243
      %p245 = scmp.eq.s32.totalorder %s244, 0
      %s247 = sadd.s32 %s246, 1
      %s248 = scalar_select %p245, %s246, %s247
      %p251 = pneg %p245
      %p252 = scmp.eq.s32.totalorder %s26, 3
      %p253 = por %p251, %p252
      %p254 = scmp.ne.s32.totalorder %s246, %s249
      %p255 = scmp.eq.s32.totalorder %s26, 0
      %p256 = por %p254, %p255
      %p257 = scmp.ne.s32.totalorder %s246, %s249
      %p258 = scmp.eq.s32.totalorder %s31, 3
      %p259 = por %p257, %p258
      %p260 = scmp.ne.s32.totalorder %s249, %s250
      %p261 = scmp.eq.s32.totalorder %s31, 0
      %p262 = por %p260, %p261
      %p263 = scmp.ne.s32.totalorder %s249, %s250
      %p264 = scmp.eq.s32.totalorder %s32, 3
      %p265 = por %p263, %p264
      %p267 = scmp.ne.s32.totalorder %s250, %s266
      %p268 = scmp.eq.s32.totalorder %s32, 0
      %p269 = por %p267, %p268
      %s270 = ssub.s32 %s33, %s45
      %p271 = scmp.eq.s32.totalorder %s270, 0
      %s273 = sadd.s32 %s272, 1
      %s274 = scalar_select %p271, %s272, %s273
      %p277 = pneg %p271
      %p278 = scmp.eq.s32.totalorder %s26, 3
      %p279 = por %p277, %p278
      %p280 = scmp.ne.s32.totalorder %s272, %s275
      %p281 = scmp.eq.s32.totalorder %s26, 0
      %p282 = por %p280, %p281
      %p283 = scmp.ne.s32.totalorder %s272, %s275
      %p284 = scmp.eq.s32.totalorder %s31, 3
      %p285 = por %p283, %p284
      %p286 = scmp.ne.s32.totalorder %s275, %s276
      %p287 = scmp.eq.s32.totalorder %s31, 0
      %p288 = por %p286, %p287
      %p289 = scmp.ne.s32.totalorder %s275, %s276
      %p290 = scmp.eq.s32.totalorder %s32, 3
      %p291 = por %p289, %p290
      %p293 = scmp.ne.s32.totalorder %s276, %s292
      %p294 = scmp.eq.s32.totalorder %s32, 0
      %p295 = por %p293, %p294
      %s296 = ssub.s32 %s33, %s45
      %s297 = ssub.s32 %s34, %s41
      %s298 = sor.u32 %s296, %s297
      %p299 = scmp.eq.s32.totalorder %s298, 0
      %s301 = sadd.s32 %s300, 1
      %s302 = scalar_select %p299, %s300, %s301
      %p305 = pneg %p299
      %p306 = scmp.eq.s32.totalorder %s26, 3
      %p307 = por %p305, %p306
      %p308 = scmp.ne.s32.totalorder %s300, %s303
      %p309 = scmp.eq.s32.totalorder %s26, 0
      %p310 = por %p308, %p309
      %p311 = scmp.ne.s32.totalorder %s300, %s303
      %p312 = scmp.eq.s32.totalorder %s31, 3
      %p313 = por %p311, %p312
      %p314 = scmp.ne.s32.totalorder %s303, %s304
      %p315 = scmp.eq.s32.totalorder %s31, 0
      %p316 = por %p314, %p315
      %p317 = scmp.ne.s32.totalorder %s303, %s304
      %p318 = scmp.eq.s32.totalorder %s32, 3
      %p319 = por %p317, %p318
      %p321 = scmp.ne.s32.totalorder %s304, %s320
      %p322 = scmp.eq.s32.totalorder %s32, 0
      %p323 = por %p321, %p322
      %p324 = scmp.le.s32.totalorder 1, %s26
      %p325 = scmp.lt.s32.totalorder %s26, 5
      %p326 = pnand %p324, %p325
      %p327 = pneg %p326
      // Predicated region
      $region9: #{tpu_custom_call.1} parent=5 // pred_check
        _
      $region10: #{tpu_custom_call.1} parent=5 // pred_check_branch
        %329 = sbr.rel (%p326) target = $region12
      $region11: #{tpu_custom_call.1} parent=5 // pred_region
        %s330 = ssub.s32 %s26, 1
        // Predicated region
        $region13: #{tpu_custom_call.1} parent=11 // pred_check
          %p331 = pneg %p59
        $region14: #{tpu_custom_call.1} parent=11 // pred_check_branch
          %333 = sbr.rel (%p331) target = $region16
        $region15: #{tpu_custom_call.1} parent=11 // pred_region
          %335 = vsyncadd [#allocation5], 0
          %s337 = sshll.u32 %s0, 4
          %s338 = int_to_ptr.vmem [resolvable:$true] %s337
          %340 = dma.vmem_to_smem %s338, 16, [#allocation2], [#allocation5]
        $region16: #{tpu_custom_call.1} parent=11 // pred_fallthru
          _
        // Predicated region
        $region17: #{tpu_custom_call.1} parent=11 // pred_check
          %p341 = pneg %p80
        $region18: #{tpu_custom_call.1} parent=11 // pred_check_branch
          %343 = sbr.rel (%p341) target = $region20
        $region19: #{tpu_custom_call.1} parent=11 // pred_region
          %345 = vsyncadd [#allocation7], 0
          %s347 = sshll.u32 %s1, 4
          %s348 = int_to_ptr.vmem [resolvable:$true] %s347
          %350 = dma.vmem_to_smem %s348, 16, [#allocation6], [#allocation7]
        $region20: #{tpu_custom_call.1} parent=11 // pred_fallthru
          _
        // Predicated region
        $region21: #{tpu_custom_call.1} parent=11 // pred_check
          %p351 = pneg %p101
        $region22: #{tpu_custom_call.1} parent=11 // pred_check_branch
          %353 = sbr.rel (%p351) target = $region24
        $region23: #{tpu_custom_call.1} parent=11 // pred_region
          _
        $region24: #{tpu_custom_call.1} parent=11 // pred_fallthru
          _
        // Predicated region
        $region25: #{tpu_custom_call.1} parent=11 // pred_check
          %p354 = pneg %p122
        $region26: #{tpu_custom_call.1} parent=11 // pred_check_branch
          %356 = sbr.rel (%p354) target = $region28
        $region27: #{tpu_custom_call.1} parent=11 // pred_region
          _
        $region28: #{tpu_custom_call.1} parent=11 // pred_fallthru
          _
        // Predicated region
        $region29: #{tpu_custom_call.1} parent=11 // pred_check
          %p357 = pneg %p143
        $region30: #{tpu_custom_call.1} parent=11 // pred_check_branch
          %359 = sbr.rel (%p357) target = $region32
        $region31: #{tpu_custom_call.1} parent=11 // pred_region
          _
        $region32: #{tpu_custom_call.1} parent=11 // pred_fallthru
          _
        // Predicated region
        $region33: #{tpu_custom_call.1} parent=11 // pred_check
          %p360 = pneg %p164
        $region34: #{tpu_custom_call.1} parent=11 // pred_check_branch
          %362 = sbr.rel (%p360) target = $region36
        $region35: #{tpu_custom_call.1} parent=11 // pred_region
          _
        $region36: #{tpu_custom_call.1} parent=11 // pred_fallthru
          _
        // Predicated region
        $region37: #{tpu_custom_call.1} parent=11 // pred_check
          %p363 = pneg %p185
        $region38: #{tpu_custom_call.1} parent=11 // pred_check_branch
          %365 = sbr.rel (%p363) target = $region40
        $region39: #{tpu_custom_call.1} parent=11 // pred_region
          %367 = vsyncadd [#allocation3], 0
          %s368 = sshll.u32 %s6, 4
          %s369 = int_to_ptr.hbm [resolvable:$true] %s368
          %s370 = sshll.u32 [#allocation8], 4
          %s371 = int_to_ptr.vmem [resolvable:$true] %s370
          %376 = dma.hbm_to_vmem [thread:$0]  %s369, 8192, %s371, [#allocation3], 512, 512, 32
        $region40: #{tpu_custom_call.1} parent=11 // pred_fallthru
          _
        // Predicated region
        $region41: #{tpu_custom_call.1} parent=11 // pred_check
          %p377 = pneg %p206
        $region42: #{tpu_custom_call.1} parent=11 // pred_check_branch
          %379 = sbr.rel (%p377) target = $region44
        $region43: #{tpu_custom_call.1} parent=11 // pred_region
          _
        $region44: #{tpu_custom_call.1} parent=11 // pred_fallthru
          _
      $region12: #{tpu_custom_call.1} parent=5 // pred_fallthru
        _
      %p380 = scmp.lt.s32.totalorder %s26, 4
      // Predicated region
      $region45: #{tpu_custom_call.1} parent=5 // pred_check
        %p381 = pneg %p380
      $region46: #{tpu_custom_call.1} parent=5 // pred_check_branch
        %383 = sbr.rel (%p381) target = $region48
      $region47: #{tpu_custom_call.1} parent=5 // pred_region
        // Predicated region
        $region49: #{tpu_custom_call.1} parent=47 // pred_check
          %p384 = pneg %p228
        $region50: #{tpu_custom_call.1} parent=47 // pred_check_branch
          %386 = sbr.rel (%p384) target = $region52
        $region51: #{tpu_custom_call.1} parent=47 // pred_region
          %s387 = sand.u32 %s218, 1
          %s388 = scalar_lea.sflag [#allocation10], %s387
          %s389 = sand.u32 %s218, 1
          %s390 = smul.addr %s389, 16
          %s391 = scalar_lea.vmem [#allocation9], %s390
          %s392 = smul.u32 4, %s34
          %394 = vsyncadd %s388, 0
          %s395 = smul.addr %s33, 8
          %s396 = sadd.s32 %s392, %s395
          %s397 = smul.addr %s396, 4
          %s398 = scalar_lea.hbm %s8, %s397
          %s400 = sshll.u32 %s398, 4
          %s401 = int_to_ptr.hbm [resolvable:$true] %s400
          %s402 = sshll.u32 %s391, 4
          %s403 = int_to_ptr.vmem [resolvable:$true] %s402
          %405 = dma.hbm_to_vmem [thread:$0]  %s401, 256, %s403, %s388
        $region52: #{tpu_custom_call.1} parent=47 // pred_fallthru
          _
        // Predicated region
        $region53: #{tpu_custom_call.1} parent=47 // pred_check
          %p406 = pneg %p256
        $region54: #{tpu_custom_call.1} parent=47 // pred_check_branch
          %408 = sbr.rel (%p406) target = $region56
        $region55: #{tpu_custom_call.1} parent=47 // pred_region
          %p409 = scmp.lt.s32.totalorder %s33, 1
          %s410 = scalar_select %p409, %s33, 1
          %p411 = scmp.lt.s32.totalorder %s34, 1
          %s412 = scalar_select %p411, %s34, 1
          %s413 = smul.addr %s410, 2
          %s414 = sadd.s32 %s412, %s413
          %s415 = smul.addr %s414, 4
          %s416 = scalar_lea.vmem %s9, %s415
        $region56: #{tpu_custom_call.1} parent=47 // pred_fallthru
          _
        // Predicated region
        $region57: #{tpu_custom_call.1} parent=47 // pred_check
          %p417 = pneg %p282
        $region58: #{tpu_custom_call.1} parent=47 // pred_check_branch
          %419 = sbr.rel (%p417) target = $region60
        $region59: #{tpu_custom_call.1} parent=47 // pred_region
          %p420 = scmp.lt.s32.totalorder %s33, 1
          %s421 = scalar_select %p420, %s33, 1
          %s422 = smul.addr %s421, 4
          %s423 = scalar_lea.vmem %s10, %s422
        $region60: #{tpu_custom_call.1} parent=47 // pred_fallthru
          _
      $region48: #{tpu_custom_call.1} parent=5 // pred_fallthru
        _
      %p424 = scmp.le.s32.totalorder 1, %s26
      %p425 = scmp.lt.s32.totalorder %s26, 5
      %p426 = pnand %p424, %p425
      %p427 = pneg %p426
      // Predicated region
      $region61: #{tpu_custom_call.1} parent=5 // pred_check
        _
      $region62: #{tpu_custom_call.1} parent=5 // pred_check_branch
        %429 = sbr.rel (%p426) target = $region64
      $region63: #{tpu_custom_call.1} parent=5 // pred_region
        %s430 = ssub.s32 %s26, 1
        // Predicated region
        $region65: #{tpu_custom_call.1} parent=63 // pred_check
          %p431 = pneg %p59
        $region66: #{tpu_custom_call.1} parent=63 // pred_check_branch
          %433 = sbr.rel (%p431) target = $region68
        $region67: #{tpu_custom_call.1} parent=63 // pred_region
          %435 = dma.done [#allocation5], 16
        $region68: #{tpu_custom_call.1} parent=63 // pred_fallthru
          _
        // Predicated region
        $region69: #{tpu_custom_call.1} parent=63 // pred_check
          %p436 = pneg %p80
        $region70: #{tpu_custom_call.1} parent=63 // pred_check_branch
          %438 = sbr.rel (%p436) target = $region72
        $region71: #{tpu_custom_call.1} parent=63 // pred_region
          %440 = dma.done [#allocation7], 16
        $region72: #{tpu_custom_call.1} parent=63 // pred_fallthru
          _
        // Predicated region
        $region73: #{tpu_custom_call.1} parent=63 // pred_check
          %p441 = pneg %p185
        $region74: #{tpu_custom_call.1} parent=63 // pred_check_branch
          %443 = sbr.rel (%p441) target = $region76
        $region75: #{tpu_custom_call.1} parent=63 // pred_region
          %445 = dma.done [#allocation3], 8192
        $region76: #{tpu_custom_call.1} parent=63 // pred_fallthru
          _
        %s446 = sand.u32 %s221, 1
        %s447 = scalar_lea.sflag [#allocation10], %s446
        %s448 = sand.u32 %s221, 1
        %s449 = smul.addr %s448, 16
        %s450 = scalar_lea.vmem [#allocation9], %s449
        // Predicated region
        $region77: #{tpu_custom_call.1} parent=63 // pred_check
          %p451 = pneg %p234
        $region78: #{tpu_custom_call.1} parent=63 // pred_check_branch
          %453 = sbr.rel (%p451) target = $region80
        $region79: #{tpu_custom_call.1} parent=63 // pred_region
          %455 = dma.done %s447, 256
        $region80: #{tpu_custom_call.1} parent=63 // pred_fallthru
          _
        %456 = sfence
        %p457 = pneg %p59
        %p458 = pneg %p56
        %p459 = pneg %p80
        %p460 = pneg %p77
        %p461 = pneg %p101
        %p462 = pneg %p98
        %p463 = pneg %p122
        %p464 = pneg %p119
        %p465 = pneg %p143
        %p466 = pneg %p140
        %p467 = pneg %p164
        %p468 = pneg %p161
        %p469 = pneg %p185
        %p470 = pneg %p182
        %p471 = pneg %p206
        %p472 = pneg %p203
        %s473 = sand.u32 %s221, 1
        %s474 = scalar_lea.sflag [#allocation10], %s473
        %s475 = sand.u32 %s221, 1
        %s476 = smul.addr %s475, 16
        %s477 = scalar_lea.vmem [#allocation9], %s476
        %p478 = pneg %p234
        %p479 = pneg %p231
        %p480 = scmp.lt.s32.totalorder %s35, 1
        %s481 = scalar_select %p480, %s35, 1
        %p482 = scmp.lt.s32.totalorder %s36, 1
        %s483 = scalar_select %p482, %s36, 1
        %s484 = smul.addr %s481, 2
        %s485 = sadd.s32 %s483, %s484
        %s486 = smul.addr %s485, 4
        %s487 = scalar_lea.vmem %s9, %s486
        %p488 = pneg %p262
        %p489 = pneg %p259
        %p490 = scmp.lt.s32.totalorder %s35, 1
        %s491 = scalar_select %p490, %s35, 1
        %s492 = smul.addr %s491, 4
        %s493 = scalar_lea.vmem %s10, %s492
        %p494 = pneg %p288
        %p495 = pneg %p285
        %p496 = pneg %p316
        %p497 = pneg %p313
        %s498 = sand.u32 %s303, 1
        %s499 = scalar_lea.sflag [#allocation4], %s498
        %s500 = sand.u32 %s303, 1
        %s501 = smul.addr %s500, 32
        %s502 = scalar_lea.vmem [#allocation11], %s501
        %s503 = smul.u32 4, %s36
        %p504 = scmp.lt.s32.totalorder %s35, 1
        %s505 = scalar_select %p504, %s35, 1
        %p506 = scmp.lt.s32.totalorder %s36, 1
        %s507 = scalar_select %p506, %s36, 1
        %s508 = smul.addr %s505, 2
        %s509 = sadd.s32 %s507, %s508
        %s510 = smul.addr %s509, 4
        %s511 = scalar_lea.vmem %s9, %s510
        %p512 = scmp.lt.s32.totalorder %s35, 1
        %s513 = scalar_select %p512, %s35, 1
        %s514 = smul.addr %s513, 4
        %s515 = scalar_lea.vmem %s10, %s514
        %s516 = smul.u32 4, %s36
        %s517 = sld [smem:[#allocation2]]
        %s518 = smax.f32 %s517, 0.0
        %s519 = sld [smem:[#allocation2 + $0x1]]
        %s520 = smax.f32 %s519, 0.0
        %s521 = sadd.f32 %s518, %s520
        %s522 = sadd.f32 %s521, 0.0001
        %v523 = vstv %s522
        %v524 = vrcp.pop %v523
        %v525 = vmul.f32 %v523, %v524
        %v526 = vsub.f32 1.0, %v525
        %v527 = vmul.f32 %v524, %v526
        %v528 = vadd.f32 %v524, %v527
        %vm529 = vweird.f32 %v523
        %vm530 = vweird.f32 %v524
        %vm531 = vmor %vm529, %vm530
        %v532 = vsel %vm531, %v524, %v528
        %v533 = vand.u32 2147483647, %v523
        %vm534 = vcmp.eq.f32.partialorder %v533, 8.507059e+37
        %v535 = vand.u32 %v523, 2147483648
        %v536 = vor.u32 1.1754944e-38, %v535
        %v537 = vsel %vm534, %v536, %v532
        %s538 = vtos %v537
        %s539 = smul.f32 %s518, %s538
        %v540 = vstv %s522
        %v541 = vrcp.pop %v540
        %v542 = vmul.f32 %v540, %v541
        %v543 = vsub.f32 1.0, %v542
        %v544 = vmul.f32 %v541, %v543
        %v545 = vadd.f32 %v541, %v544
        %vm546 = vweird.f32 %v540
        %vm547 = vweird.f32 %v541
        %vm548 = vmor %vm546, %vm547
        %v549 = vsel %vm548, %v541, %v545
        %v550 = vand.u32 2147483647, %v540
        %vm551 = vcmp.eq.f32.partialorder %v550, 8.507059e+37
        %v552 = vand.u32 %v540, 2147483648
        %v553 = vor.u32 1.1754944e-38, %v552
        %v554 = vsel %vm551, %v553, %v549
        %s555 = vtos %v554
        %s556 = smul.f32 %s520, %s555
        %s557 = sld [smem:[#allocation6]]
        %s558 = smax.f32 %s557, 0.0
        %s559 = sld [smem:[#allocation6 + $0x1]]
        %s560 = smax.f32 %s559, 0.0
        %s561 = sld [smem:[#allocation6 + $0x2]]
        %s562 = smax.f32 %s561, 0.0
        %s563 = sadd.f32 %s558, %s560
        %s564 = sadd.f32 %s563, %s562
        %s565 = sadd.f32 %s564, 0.0001
        %v566 = vstv %s565
        %v567 = vrcp.pop %v566
        %v568 = vmul.f32 %v566, %v567
        %v569 = vsub.f32 1.0, %v568
        %v570 = vmul.f32 %v567, %v569
        %v571 = vadd.f32 %v567, %v570
        %vm572 = vweird.f32 %v566
        %vm573 = vweird.f32 %v567
        %vm574 = vmor %vm572, %vm573
        %v575 = vsel %vm574, %v567, %v571
        %v576 = vand.u32 2147483647, %v566
        %vm577 = vcmp.eq.f32.partialorder %v576, 8.507059e+37
        %v578 = vand.u32 %v566, 2147483648
        %v579 = vor.u32 1.1754944e-38, %v578
        %v580 = vsel %vm577, %v579, %v575
        %s581 = vtos %v580
        %s582 = smul.f32 %s558, %s581
        %v583 = vstv %s565
        %v584 = vrcp.pop %v583
        %v585 = vmul.f32 %v583, %v584
        %v586 = vsub.f32 1.0, %v585
        %v587 = vmul.f32 %v584, %v586
        %v588 = vadd.f32 %v584, %v587
        %vm589 = vweird.f32 %v583
        %vm590 = vweird.f32 %v584
        %vm591 = vmor %vm589, %vm590
        %v592 = vsel %vm591, %v584, %v588
        %v593 = vand.u32 2147483647, %v583
        %vm594 = vcmp.eq.f32.partialorder %v593, 8.507059e+37
        %v595 = vand.u32 %v583, 2147483648
        %v596 = vor.u32 1.1754944e-38, %v595
        %v597 = vsel %vm594, %v596, %v592
        %s598 = vtos %v597
        %s599 = smul.f32 %s560, %s598
        %v600 = vstv %s565
        %v601 = vrcp.pop %v600
        %v602 = vmul.f32 %v600, %v601
        %v603 = vsub.f32 1.0, %v602
        %v604 = vmul.f32 %v601, %v603
        %v605 = vadd.f32 %v601, %v604
        %vm606 = vweird.f32 %v600
        %vm607 = vweird.f32 %v601
        %vm608 = vmor %vm606, %vm607
        %v609 = vsel %vm608, %v601, %v605
        %v610 = vand.u32 2147483647, %v600
        %vm611 = vcmp.eq.f32.partialorder %v610, 8.507059e+37
        %v612 = vand.u32 %v600, 2147483648
        %v613 = vor.u32 1.1754944e-38, %v612
        %v614 = vsel %vm611, %v613, %v609
        %s615 = vtos %v614
        %s616 = smul.f32 %s562, %s615
        %v617 = vld [vmem:[%s450] sm:$0xff]
        %v618 = vld [vmem:[%s450 + $0x8] sm:$0xff]
        %v619 = vld [vmem:[%s511] sm:$0xf]
        %v620 = vld [vmem:[%s515] sm:$0xf]
        %622 = vset.pattern.permute.xlu0 0
        %623 = vperm.xlu0 %622, %v620
        %v624 = vpop.permute.xlu0 %623
        %v626 = vlaneseq
        %v627 = vand.u32 %v626, 127
        %v628 = vadd.s32 %v627, 128
        %v629 = vadd.s32 %v627, 256
        %v630 = vadd.s32 %v627, 384
        %v631 = vld [vmem:[%s7] sm:$0xf]
        %v632 = vand.u32 %v627, 1
        %v633 = vand.u32 %v628, 1
        %v634 = vand.u32 %v629, 1
        %v635 = vand.u32 %v630, 1
        %vm636 = vcmp.eq.s32.totalorder %v632, 0
        %vm637 = vcmp.eq.s32.totalorder %v633, 0
        %vm638 = vcmp.eq.s32.totalorder %v634, 0
        %vm639 = vcmp.eq.s32.totalorder %v635, 0
        %v640 = vand.u32 %v627, 2
        %v641 = vand.u32 %v628, 2
        %v642 = vand.u32 %v629, 2
        %v643 = vand.u32 %v630, 2
        %vm644 = vcmp.eq.s32.totalorder %v640, 0
        %vm645 = vcmp.eq.s32.totalorder %v641, 0
        %vm646 = vcmp.eq.s32.totalorder %v642, 0
        %vm647 = vcmp.eq.s32.totalorder %v643, 0
        %v648 = vand.u32 %v631, 1
        %vm649 = vcmp.eq.s32.totalorder %v648, 0
        %v650 = vand.u32 %v631, 2
        %vm651 = vcmp.eq.s32.totalorder %v650, 0
        %v652 = vld [vmem:[#allocation8] sm:$0xff]
        %v653 = vld [vmem:[#allocation8 + $0x8] sm:$0xff]
        %v654 = vld [vmem:[#allocation8 + $0x10] sm:$0xff]
        %v655 = vld [vmem:[#allocation8 + $0x18] sm:$0xff]
        %v656 = vld [vmem:[#allocation8 + $0x20] sm:$0xff]
        %v657 = vld [vmem:[#allocation8 + $0x28] sm:$0xff]
        %v658 = vld [vmem:[#allocation8 + $0x30] sm:$0xff]
        %v659 = vld [vmem:[#allocation8 + $0x38] sm:$0xff]
        %v660 = vld [vmem:[#allocation8 + $0x40] sm:$0xff]
        %v661 = vld [vmem:[#allocation8 + $0x48] sm:$0xff]
        %v662 = vld [vmem:[#allocation8 + $0x50] sm:$0xff]
        %v663 = vld [vmem:[#allocation8 + $0x58] sm:$0xff]
        %v664 = vld [vmem:[#allocation8 + $0x60] sm:$0xff]
        %v665 = vld [vmem:[#allocation8 + $0x68] sm:$0xff]
        %v666 = vld [vmem:[#allocation8 + $0x70] sm:$0xff]
        %v667 = vld [vmem:[#allocation8 + $0x78] sm:$0xff]
        %v668 = vld [vmem:[#allocation8 + $0x80] sm:$0xff]
        %v669 = vld [vmem:[#allocation8 + $0x88] sm:$0xff]
        %v670 = vld [vmem:[#allocation8 + $0x90] sm:$0xff]
        %v671 = vld [vmem:[#allocation8 + $0x98] sm:$0xff]
        %v672 = vld [vmem:[#allocation8 + $0xa0] sm:$0xff]
        %v673 = vld [vmem:[#allocation8 + $0xa8] sm:$0xff]
        %v674 = vld [vmem:[#allocation8 + $0xb0] sm:$0xff]
        %v675 = vld [vmem:[#allocation8 + $0xb8] sm:$0xff]
        %v676 = vld [vmem:[#allocation8 + $0xc0] sm:$0xff]
        %v677 = vld [vmem:[#allocation8 + $0xc8] sm:$0xff]
        %v678 = vld [vmem:[#allocation8 + $0xd0] sm:$0xff]
        %v679 = vld [vmem:[#allocation8 + $0xd8] sm:$0xff]
        %v680 = vld [vmem:[#allocation8 + $0xe0] sm:$0xff]
        %v681 = vld [vmem:[#allocation8 + $0xe8] sm:$0xff]
        %v682 = vld [vmem:[#allocation8 + $0xf0] sm:$0xff]
        %v683 = vld [vmem:[#allocation8 + $0xf8] sm:$0xff]
        %v684 = vld [vmem:[#allocation8 + $0x100] sm:$0xff]
        %v685 = vld [vmem:[#allocation8 + $0x108] sm:$0xff]
        %v686 = vld [vmem:[#allocation8 + $0x110] sm:$0xff]
        %v687 = vld [vmem:[#allocation8 + $0x118] sm:$0xff]
        %v688 = vld [vmem:[#allocation8 + $0x120] sm:$0xff]
        %v689 = vld [vmem:[#allocation8 + $0x128] sm:$0xff]
        %v690 = vld [vmem:[#allocation8 + $0x130] sm:$0xff]
        %v691 = vld [vmem:[#allocation8 + $0x138] sm:$0xff]
        %v692 = vld [vmem:[#allocation8 + $0x140] sm:$0xff]
        %v693 = vld [vmem:[#allocation8 + $0x148] sm:$0xff]
        %v694 = vld [vmem:[#allocation8 + $0x150] sm:$0xff]
        %v695 = vld [vmem:[#allocation8 + $0x158] sm:$0xff]
        %v696 = vld [vmem:[#allocation8 + $0x160] sm:$0xff]
        %v697 = vld [vmem:[#allocation8 + $0x168] sm:$0xff]
        %v698 = vld [vmem:[#allocation8 + $0x170] sm:$0xff]
        %v699 = vld [vmem:[#allocation8 + $0x178] sm:$0xff]
        %v700 = vld [vmem:[#allocation8 + $0x180] sm:$0xff]
        %v701 = vld [vmem:[#allocation8 + $0x188] sm:$0xff]
        %v702 = vld [vmem:[#allocation8 + $0x190] sm:$0xff]
        %v703 = vld [vmem:[#allocation8 + $0x198] sm:$0xff]
        %v704 = vld [vmem:[#allocation8 + $0x1a0] sm:$0xff]
        %v705 = vld [vmem:[#allocation8 + $0x1a8] sm:$0xff]
        %v706 = vld [vmem:[#allocation8 + $0x1b0] sm:$0xff]
        %v707 = vld [vmem:[#allocation8 + $0x1b8] sm:$0xff]
        %v708 = vld [vmem:[#allocation8 + $0x1c0] sm:$0xff]
        %v709 = vld [vmem:[#allocation8 + $0x1c8] sm:$0xff]
        %v710 = vld [vmem:[#allocation8 + $0x1d0] sm:$0xff]
        %v711 = vld [vmem:[#allocation8 + $0x1d8] sm:$0xff]
        %v712 = vld [vmem:[#allocation8 + $0x1e0] sm:$0xff]
        %v713 = vld [vmem:[#allocation8 + $0x1e8] sm:$0xff]
        %v714 = vld [vmem:[#allocation8 + $0x1f0] sm:$0xff]
        %v715 = vld [vmem:[#allocation8 + $0x1f8] sm:$0xff]
        %716 = vmatpush.msra.mxu0 %v712
        %717 = vmatpush.msra.mxu0 %v708
        %718 = vmatpush.msra.mxu0 %v704
        %719 = vmatpush.msra.mxu0 %v700
        %720 = vmatpush.msra.mxu0 %v696
        %721 = vmatpush.msra.mxu0 %v692
        %722 = vmatpush.msra.mxu0 %v688
        %723 = vmatpush.msra.mxu0 %v684
        %724 = vmatpush.msra.mxu0 %v680
        %725 = vmatpush.msra.mxu0 %v676
        %726 = vmatpush.msra.mxu0 %v672
        %727 = vmatpush.msra.mxu0 %v668
        %728 = vmatpush.msra.mxu0 %v664
        %729 = vmatpush.msra.mxu0 %v660
        %730 = vmatpush.msra.mxu0 %v656
        %731 = vmatpush.msra.mxu0 %v652
        %732 = vmatmul.f32.gmra.mxu0 %v619
        %v733 = vpop.f32.mrf.mxu0
        %v734 = vadd.f32 0.0, %v733
        %735 = vdwg.mxu0
        %736 = vmatpush.msra.mxu0 %v713
        %737 = vmatpush.msra.mxu0 %v709
        %738 = vmatpush.msra.mxu0 %v705
        %739 = vmatpush.msra.mxu0 %v701
        %740 = vmatpush.msra.mxu0 %v697
        %741 = vmatpush.msra.mxu0 %v693
        %742 = vmatpush.msra.mxu0 %v689
        %743 = vmatpush.msra.mxu0 %v685
        %744 = vmatpush.msra.mxu0 %v681
        %745 = vmatpush.msra.mxu0 %v677
        %746 = vmatpush.msra.mxu0 %v673
        %747 = vmatpush.msra.mxu0 %v669
        %748 = vmatpush.msra.mxu0 %v665
        %749 = vmatpush.msra.mxu0 %v661
        %750 = vmatpush.msra.mxu0 %v657
        %751 = vmatpush.msra.mxu0 %v653
        %752 = vmatmul.f32.gmra.mxu0 %v619
        %v753 = vpop.f32.mrf.mxu0
        %v754 = vadd.f32 0.0, %v753
        %755 = vdwg.mxu0
        %756 = vmatpush.msra.mxu0 %v714
        %757 = vmatpush.msra.mxu0 %v710
        %758 = vmatpush.msra.mxu0 %v706
        %759 = vmatpush.msra.mxu0 %v702
        %760 = vmatpush.msra.mxu0 %v698
        %761 = vmatpush.msra.mxu0 %v694
        %762 = vmatpush.msra.mxu0 %v690
        %763 = vmatpush.msra.mxu0 %v686
        %764 = vmatpush.msra.mxu0 %v682
        %765 = vmatpush.msra.mxu0 %v678
        %766 = vmatpush.msra.mxu0 %v674
        %767 = vmatpush.msra.mxu0 %v670
        %768 = vmatpush.msra.mxu0 %v666
        %769 = vmatpush.msra.mxu0 %v662
        %770 = vmatpush.msra.mxu0 %v658
        %771 = vmatpush.msra.mxu0 %v654
        %772 = vmatmul.f32.gmra.mxu0 %v619
        %v773 = vpop.f32.mrf.mxu0
        %v774 = vadd.f32 0.0, %v773
        %775 = vdwg.mxu0
        %776 = vmatpush.msra.mxu0 %v715
        %777 = vmatpush.msra.mxu0 %v711
        %778 = vmatpush.msra.mxu0 %v707
        %779 = vmatpush.msra.mxu0 %v703
        %780 = vmatpush.msra.mxu0 %v699
        %781 = vmatpush.msra.mxu0 %v695
        %782 = vmatpush.msra.mxu0 %v691
        %783 = vmatpush.msra.mxu0 %v687
        %784 = vmatpush.msra.mxu0 %v683
        %785 = vmatpush.msra.mxu0 %v679
        %786 = vmatpush.msra.mxu0 %v675
        %787 = vmatpush.msra.mxu0 %v671
        %788 = vmatpush.msra.mxu0 %v667
        %789 = vmatpush.msra.mxu0 %v663
        %790 = vmatpush.msra.mxu0 %v659
        %791 = vmatpush.msra.mxu0 %v655
        %792 = vmatmul.f32.gmra.mxu0 %v619
        %v793 = vpop.f32.mrf.mxu0
        %v794 = vadd.f32 0.0, %v793
        %795 = vdwg.mxu0
        %v796 = vstv %s539
        %v797 = vmul.f32 %v796, %v734
        %v798 = vmul.f32 %v796, %v754
        %v799 = vmul.f32 %v796, %v774
        %v800 = vmul.f32 %v796, %v794
        %v801 = vstv %s556
        %v802 = vmul.f32 %v801, %v624
        %v803 = vadd.f32 %v797, %v802
        %v804 = vadd.f32 %v798, %v802
        %v805 = vadd.f32 %v799, %v802
        %v806 = vadd.f32 %v800, %v802
        %v807 = vmul.f32 %v796, %v617
        %v808 = vmul.f32 %v796, %v618
        %v809 = vmul.f32 %v801, %v803
        %v810 = vmul.f32 %v801, %v804
        %v811 = vmul.f32 %v801, %v805
        %v812 = vmul.f32 %v801, %v806
        %v817 = vrot.slane %v810, 4
        %v818 = vrot.slane %v812, 4
        %vm819 = vcmask 1043456
        %v820 = vsel %vm819, %v809, %v817
        %v821 = vsel %vm819, %v811, %v818
        %v824 = vadd.f32 %v807, %v820
        %v825 = vadd.f32 %v808, %v821
        %828 = vst [vmem:[#allocation1] ss:$2 sm:$0xff] %v824
        %s829 = scalar_lea.vmem [#allocation1], 16
        %830 = vst [vmem:[%s829] ss:$2 sm:$0xff] %v825
        %v831 = vld.sshfl [vmem:[#allocation1] sm:$0xff pattern:$0x75316420]
        %v832 = vld.sshfl [vmem:[#allocation1 + $0x8] sm:$0xff pattern:$0x75316420]
        %v833 = vld.sshfl [vmem:[#allocation1 + $0x10] sm:$0xff pattern:$0x75316420]
        %v834 = vld.sshfl [vmem:[#allocation1 + $0x18] sm:$0xff pattern:$0x75316420]
        %835 = vrot.lane.b32.xlu0 %v831, 127
        %v836 = vpop.permute.xlu0 %835
        %837 = vrot.lane.b32.xlu0 %v832, 127
        %v838 = vpop.permute.xlu0 %837
        %839 = vrot.lane.b32.xlu0 %v833, 127
        %v840 = vpop.permute.xlu0 %839
        %841 = vrot.lane.b32.xlu0 %v834, 127
        %v842 = vpop.permute.xlu0 %841
        %vm843 = vcmask 1039360
        %v844 = vsel %vm843, %v836, %v838
        %v845 = vsel %vm843, %v838, %v840
        %v846 = vsel %vm843, %v840, %v842
        %851 = vst [vmem:[#allocation1] ss:$2 sm:$0xff] %v824
        %v852 = vld.sshfl [vmem:[#allocation1] sm:$0xff pattern:$0x75316420]
        %853 = vrot.lane.b32.xlu0 %v852, 127
        %v854 = vpop.permute.xlu0 %853
        %v856 = vsel %vm843, %v842, %v854
        %857 = vst [vmem:[#allocation1] ss:$2 sm:$0xff] %v825
        %v858 = vld.sshfl [vmem:[#allocation1 + $0x8] sm:$0xff pattern:$0x75316420]
        %859 = vrot.lane.b32.xlu0 %v858, 1
        %v860 = vpop.permute.xlu0 %859
        %862 = vst [vmem:[#allocation1] ss:$2 sm:$0xff] %v824
        %s863 = scalar_lea.vmem [#allocation1], 16
        %864 = vst [vmem:[%s863] ss:$2 sm:$0xff] %v825
        %v865 = vld.sshfl [vmem:[#allocation1] sm:$0xff pattern:$0x75316420]
        %v866 = vld.sshfl [vmem:[#allocation1 + $0x8] sm:$0xff pattern:$0x75316420]
        %v867 = vld.sshfl [vmem:[#allocation1 + $0x10] sm:$0xff pattern:$0x75316420]
        %v868 = vld.sshfl [vmem:[#allocation1 + $0x18] sm:$0xff pattern:$0x75316420]
        %869 = vrot.lane.b32.xlu0 %v865, 1
        %v870 = vpop.permute.xlu0 %869
        %871 = vrot.lane.b32.xlu0 %v866, 1
        %v872 = vpop.permute.xlu0 %871
        %873 = vrot.lane.b32.xlu0 %v867, 1
        %v874 = vpop.permute.xlu0 %873
        %875 = vrot.lane.b32.xlu0 %v868, 1
        %v876 = vpop.permute.xlu0 %875
        %vm877 = vcmask 7168
        %v878 = vsel %vm877, %v870, %v872
        %v879 = vsel %vm877, %v872, %v874
        %v880 = vsel %vm877, %v874, %v876
        %v885 = vsel %vm877, %v860, %v870
        %v886 = vsel %vm636, 1, 0
        %v887 = vsel %vm637, 1, 0
        %v888 = vsel %vm638, 1, 0
        %v889 = vsel %vm639, 1, 0
        %vm890 = vcmp.eq.s32.totalorder %v886, 1
        %vm891 = vcmp.eq.s32.totalorder %v887, 1
        %vm892 = vcmp.eq.s32.totalorder %v888, 1
        %vm893 = vcmp.eq.s32.totalorder %v889, 1
        %v894 = vsel %vm890, %v844, %v885
        %v895 = vsel %vm891, %v845, %v878
        %v896 = vsel %vm892, %v846, %v879
        %v897 = vsel %vm893, %v856, %v880
        %v902 = vrot.slane %v895, 4
        %v903 = vrot.slane %v897, 4
        %v904 = vsel %vm819, %v894, %v902
        %v905 = vsel %vm819, %v896, %v903
        %v908 = vmax.f32 %v824, %v904
        %v909 = vmax.f32 %v825, %v905
        %912 = vst [vmem:[#allocation1] ss:$2 sm:$0xff] %v908
        %s913 = scalar_lea.vmem [#allocation1], 16
        %914 = vst [vmem:[%s913] ss:$2 sm:$0xff] %v909
        %v915 = vld.sshfl [vmem:[#allocation1] sm:$0xff pattern:$0x75316420]
        %v916 = vld.sshfl [vmem:[#allocation1 + $0x8] sm:$0xff pattern:$0x75316420]
        %v917 = vld.sshfl [vmem:[#allocation1 + $0x10] sm:$0xff pattern:$0x75316420]
        %v918 = vld.sshfl [vmem:[#allocation1 + $0x18] sm:$0xff pattern:$0x75316420]
        %919 = vrot.lane.b32.xlu0 %v915, 96
        %v920 = vpop.permute.xlu0 %919
        %921 = vrot.lane.b32.xlu0 %v916, 96
        %v922 = vpop.permute.xlu0 %921
        %923 = vrot.lane.b32.xlu0 %v917, 96
        %v924 = vpop.permute.xlu0 %923
        %925 = vrot.lane.b32.xlu0 %v918, 96
        %v926 = vpop.permute.xlu0 %925
        %vm927 = vcmask 785408
        %v928 = vsel %vm927, %v920, %v922
        %v929 = vsel %vm927, %v922, %v924
        %v930 = vsel %vm927, %v924, %v926
        %935 = vst [vmem:[#allocation1] ss:$2 sm:$0xff] %v908
        %v936 = vld.sshfl [vmem:[#allocation1] sm:$0xff pattern:$0x75316420]
        %937 = vrot.lane.b32.xlu0 %v936, 96
        %v938 = vpop.permute.xlu0 %937
        %v940 = vsel %vm927, %v926, %v938
        %941 = vst [vmem:[#allocation1] ss:$2 sm:$0xff] %v909
        %v942 = vld.sshfl [vmem:[#allocation1 + $0x8] sm:$0xff pattern:$0x75316420]
        %943 = vrot.lane.b32.xlu0 %v942, 32
        %v944 = vpop.permute.xlu0 %943
        %946 = vst [vmem:[#allocation1] ss:$2 sm:$0xff] %v908
        %s947 = scalar_lea.vmem [#allocation1], 16
        %948 = vst [vmem:[%s947] ss:$2 sm:$0xff] %v909
        %v949 = vld.sshfl [vmem:[#allocation1] sm:$0xff pattern:$0x75316420]
        %v950 = vld.sshfl [vmem:[#allocation1 + $0x8] sm:$0xff pattern:$0x75316420]
        %v951 = vld.sshfl [vmem:[#allocation1 + $0x10] sm:$0xff pattern:$0x75316420]
        %v952 = vld.sshfl [vmem:[#allocation1 + $0x18] sm:$0xff pattern:$0x75316420]
        %953 = vrot.lane.b32.xlu0 %v949, 32
        %v954 = vpop.permute.xlu0 %953
        %955 = vrot.lane.b32.xlu0 %v950, 32
        %v956 = vpop.permute.xlu0 %955
        %957 = vrot.lane.b32.xlu0 %v951, 32
        %v958 = vpop.permute.xlu0 %957
        %959 = vrot.lane.b32.xlu0 %v952, 32
        %v960 = vpop.permute.xlu0 %959
        %vm961 = vcmask 261120
        %v962 = vsel %vm961, %v954, %v956
        %v963 = vsel %vm961, %v956, %v958
        %v964 = vsel %vm961, %v958, %v960
        %v969 = vsel %vm961, %v944, %v954
        %v970 = vsel %vm649, 1, 0
        %v971 = vperm.slane %v970, 0
        %v972 = vperm.slane %v970, 1
        %v973 = vperm.slane %v970, 2
        %v974 = vperm.slane %v970, 3
        %vm975 = vcmp.eq.s32.totalorder %v971, 1
        %vm976 = vcmp.eq.s32.totalorder %v972, 1
        %vm977 = vcmp.eq.s32.totalorder %v973, 1
        %vm978 = vcmp.eq.s32.totalorder %v974, 1
        %v979 = vsel %vm975, %v928, %v969
        %v980 = vsel %vm976, %v929, %v962
        %v981 = vsel %vm977, %v930, %v963
        %v982 = vsel %vm978, %v940, %v964
        %v987 = vrot.slane %v980, 4
        %v988 = vrot.slane %v982, 4
        %v989 = vsel %vm819, %v979, %v987
        %v990 = vsel %vm819, %v981, %v988
        %v993 = vmax.f32 %v908, %v989
        %v994 = vmax.f32 %v909, %v990
        %v995 = vstv %s582
        %v996 = vmul.f32 %v995, %v803
        %v997 = vmul.f32 %v995, %v804
        %v998 = vmul.f32 %v995, %v805
        %v999 = vmul.f32 %v995, %v806
        %v1000 = vstv %s599
        %v1001 = vmul.f32 %v1000, %v993
        %v1002 = vmul.f32 %v1000, %v994
        %1005 = vst [vmem:[#allocation1] ss:$2 sm:$0xff] %v1001
        %s1006 = scalar_lea.vmem [#allocation1], 16
        %1007 = vst [vmem:[%s1006] ss:$2 sm:$0xff] %v1002
        %v1008 = vld.sshfl [vmem:[#allocation1] sm:$0xff pattern:$0x75316420]
        %v1009 = vld.sshfl [vmem:[#allocation1 + $0x8] sm:$0xff pattern:$0x75316420]
        %v1010 = vld.sshfl [vmem:[#allocation1 + $0x10] sm:$0xff pattern:$0x75316420]
        %v1011 = vld.sshfl [vmem:[#allocation1 + $0x18] sm:$0xff pattern:$0x75316420]
        %v1016 = vadd.f32 %v996, %v1008
        %v1017 = vadd.f32 %v997, %v1009
        %v1018 = vadd.f32 %v998, %v1010
        %v1019 = vadd.f32 %v999, %v1011
        %v1020 = vstv %s616
        %v1021 = vmul.f32 %v1020, %v624
        %v1022 = vadd.f32 %v1016, %v1021
        %v1023 = vadd.f32 %v1017, %v1021
        %v1024 = vadd.f32 %v1018, %v1021
        %v1025 = vadd.f32 %v1019, %v1021
        %1030 = vrot.lane.b32.xlu0 %v1022, 126
        %v1031 = vpop.permute.xlu0 %1030
        %1032 = vrot.lane.b32.xlu0 %v1023, 126
        %v1033 = vpop.permute.xlu0 %1032
        %1034 = vrot.lane.b32.xlu0 %v1024, 126
        %v1035 = vpop.permute.xlu0 %1034
        %1036 = vrot.lane.b32.xlu0 %v1025, 126
        %v1037 = vpop.permute.xlu0 %1036
        %vm1038 = vcmask 1031168
        %v1039 = vsel %vm1038, %v1031, %v1033
        %v1040 = vsel %vm1038, %v1033, %v1035
        %v1041 = vsel %vm1038, %v1035, %v1037
        %v1047 = vsel %vm1038, %v1037, %v1031
        %1048 = vrot.lane.b32.xlu0 %v1025, 2
        %v1049 = vpop.permute.xlu0 %1048
        %1051 = vrot.lane.b32.xlu0 %v1022, 2
        %v1052 = vpop.permute.xlu0 %1051
        %1053 = vrot.lane.b32.xlu0 %v1023, 2
        %v1054 = vpop.permute.xlu0 %1053
        %1055 = vrot.lane.b32.xlu0 %v1024, 2
        %v1056 = vpop.permute.xlu0 %1055
        %vm1057 = vcmask 15360
        %v1058 = vsel %vm1057, %v1052, %v1054
        %v1059 = vsel %vm1057, %v1054, %v1056
        %v1060 = vsel %vm1057, %v1056, %v1049
        %v1065 = vsel %vm1057, %v1049, %v1052
        %v1066 = vsel %vm644, 1, 0
        %v1067 = vsel %vm645, 1, 0
        %v1068 = vsel %vm646, 1, 0
        %v1069 = vsel %vm647, 1, 0
        %vm1070 = vcmp.eq.s32.totalorder %v1066, 1
        %vm1071 = vcmp.eq.s32.totalorder %v1067, 1
        %vm1072 = vcmp.eq.s32.totalorder %v1068, 1
        %vm1073 = vcmp.eq.s32.totalorder %v1069, 1
        %v1074 = vsel %vm1070, %v1039, %v1065
        %v1075 = vsel %vm1071, %v1040, %v1058
        %v1076 = vsel %vm1072, %v1041, %v1059
        %v1077 = vsel %vm1073, %v1047, %v1060
        %v1078 = vmax.f32 %v1022, %v1074
        %v1079 = vmax.f32 %v1023, %v1075
        %v1080 = vmax.f32 %v1024, %v1076
        %v1081 = vmax.f32 %v1025, %v1077
        %1086 = vrot.lane.b32.xlu0 %v1078, 64
        %v1087 = vpop.permute.xlu0 %1086
        %1088 = vrot.lane.b32.xlu0 %v1079, 64
        %v1089 = vpop.permute.xlu0 %1088
        %1090 = vrot.lane.b32.xlu0 %v1080, 64
        %v1091 = vpop.permute.xlu0 %1090
        %1092 = vrot.lane.b32.xlu0 %v1081, 64
        %v1093 = vpop.permute.xlu0 %1092
        %vm1094 = vcmask 523264
        %v1095 = vsel %vm1094, %v1087, %v1089
        %v1096 = vsel %vm1094, %v1089, %v1091
        %v1097 = vsel %vm1094, %v1091, %v1093
        %v1103 = vsel %vm1094, %v1093, %v1087
        %v1104 = vsel %vm651, 1, 0
        %v1105 = vperm.slane %v1104, 0
        %v1106 = vperm.slane %v1104, 1
        %v1107 = vperm.slane %v1104, 2
        %v1108 = vperm.slane %v1104, 3
        %vm1109 = vcmp.eq.s32.totalorder %v1105, 1
        %vm1110 = vcmp.eq.s32.totalorder %v1106, 1
        %vm1111 = vcmp.eq.s32.totalorder %v1107, 1
        %vm1112 = vcmp.eq.s32.totalorder %v1108, 1
        %v1113 = vsel %vm1109, %v1095, %v1103
        %v1114 = vsel %vm1110, %v1096, %v1095
        %v1115 = vsel %vm1111, %v1097, %v1096
        %v1116 = vsel %vm1112, %v1103, %v1097
        %v1117 = vmax.f32 %v1078, %v1113
        %v1118 = vmax.f32 %v1079, %v1114
        %v1119 = vmax.f32 %v1080, %v1115
        %v1120 = vmax.f32 %v1081, %v1116
        %v1121 = vmul.f32 %v995, %v624
        %v1122 = vmul.f32 %v1000, %v1117
        %v1123 = vmul.f32 %v1000, %v1118
        %v1124 = vmul.f32 %v1000, %v1119
        %v1125 = vmul.f32 %v1000, %v1120
        %v1126 = vadd.f32 %v1121, %v1122
        %v1127 = vadd.f32 %v1121, %v1123
        %v1128 = vadd.f32 %v1121, %v1124
        %v1129 = vadd.f32 %v1121, %v1125
        %v1130 = vld [vmem:[%s2] sm:$0xff]
        %v1131 = vld [vmem:[%s3] sm:$0xff]
        %vm1132 = vcmask 31744
        %v1134 = vsel %vm1132, %v1131, 0
        %v1136 = vsel %vm819, %v1022, 0
        %v1138 = vsel %vm819, %v1023, 0
        %v1140 = vsel %vm819, %v1024, 0
        %v1142 = vsel %vm819, %v1025, 0
        %1144 = vmatpush.msra.mxu0 0.0
        %1145 = vmatpush.msra.mxu0 0.0
        %1146 = vmatpush.msra.mxu0 0.0
        %1147 = vmatpush.msra.mxu0 0.0
        %1148 = vmatpush.msra.mxu0 0.0
        %1149 = vmatpush.msra.mxu0 0.0
        %1150 = vmatpush.msra.mxu0 0.0
        %1151 = vmatpush.msra.mxu0 0.0
        %1152 = vmatpush.msra.mxu0 0.0
        %1153 = vmatpush.msra.mxu0 0.0
        %1154 = vmatpush.msra.mxu0 0.0
        %1155 = vmatpush.msra.mxu0 0.0
        %1156 = vmatpush.msra.mxu0 0.0
        %1157 = vmatpush.msra.mxu0 0.0
        %1158 = vmatpush.msra.mxu0 0.0
        %1159 = vmatpush.msra.mxu0 %v1136
        %1160 = vmatmul.f32.gmra.mxu0 %v1134
        %v1161 = vpop.f32.mrf.mxu0
        %v1162 = vadd.f32 0.0, %v1161
        %1163 = vdwg.mxu0
        %1164 = vmatpush.msra.mxu0 0.0
        %1165 = vmatpush.msra.mxu0 0.0
        %1166 = vmatpush.msra.mxu0 0.0
        %1167 = vmatpush.msra.mxu0 0.0
        %1168 = vmatpush.msra.mxu0 0.0
        %1169 = vmatpush.msra.mxu0 0.0
        %1170 = vmatpush.msra.mxu0 0.0
        %1171 = vmatpush.msra.mxu0 0.0
        %1172 = vmatpush.msra.mxu0 0.0
        %1173 = vmatpush.msra.mxu0 0.0
        %1174 = vmatpush.msra.mxu0 0.0
        %1175 = vmatpush.msra.mxu0 0.0
        %1176 = vmatpush.msra.mxu0 0.0
        %1177 = vmatpush.msra.mxu0 0.0
        %1178 = vmatpush.msra.mxu0 0.0
        %1179 = vmatpush.msra.mxu0 %v1138
        %1180 = vmatmul.f32.gmra.mxu0 %v1134
        %v1181 = vpop.f32.mrf.mxu0
        %v1182 = vadd.f32 0.0, %v1181
        %1183 = vdwg.mxu0
        %1184 = vmatpush.msra.mxu0 0.0
        %1185 = vmatpush.msra.mxu0 0.0
        %1186 = vmatpush.msra.mxu0 0.0
        %1187 = vmatpush.msra.mxu0 0.0
        %1188 = vmatpush.msra.mxu0 0.0
        %1189 = vmatpush.msra.mxu0 0.0
        %1190 = vmatpush.msra.mxu0 0.0
        %1191 = vmatpush.msra.mxu0 0.0
        %1192 = vmatpush.msra.mxu0 0.0
        %1193 = vmatpush.msra.mxu0 0.0
        %1194 = vmatpush.msra.mxu0 0.0
        %1195 = vmatpush.msra.mxu0 0.0
        %1196 = vmatpush.msra.mxu0 0.0
        %1197 = vmatpush.msra.mxu0 0.0
        %1198 = vmatpush.msra.mxu0 0.0
        %1199 = vmatpush.msra.mxu0 %v1140
        %1200 = vmatmul.f32.gmra.mxu0 %v1134
        %v1201 = vpop.f32.mrf.mxu0
        %v1202 = vadd.f32 0.0, %v1201
        %1203 = vdwg.mxu0
        %1204 = vmatpush.msra.mxu0 0.0
        %1205 = vmatpush.msra.mxu0 0.0
        %1206 = vmatpush.msra.mxu0 0.0
        %1207 = vmatpush.msra.mxu0 0.0
        %1208 = vmatpush.msra.mxu0 0.0
        %1209 = vmatpush.msra.mxu0 0.0
        %1210 = vmatpush.msra.mxu0 0.0
        %1211 = vmatpush.msra.mxu0 0.0
        %1212 = vmatpush.msra.mxu0 0.0
        %1213 = vmatpush.msra.mxu0 0.0
        %1214 = vmatpush.msra.mxu0 0.0
        %1215 = vmatpush.msra.mxu0 0.0
        %1216 = vmatpush.msra.mxu0 0.0
        %1217 = vmatpush.msra.mxu0 0.0
        %1218 = vmatpush.msra.mxu0 0.0
        %1219 = vmatpush.msra.mxu0 %v1142
        %1220 = vmatmul.f32.gmra.mxu0 %v1134
        %v1221 = vpop.f32.mrf.mxu0
        %v1222 = vadd.f32 0.0, %v1221
        %1223 = vdwg.mxu0
        %1224 = vst [vmem:[#allocation1] ss:$2 sm:$0xff] %v824
        %s1225 = scalar_lea.vmem [#allocation1], 16
        %1226 = vst [vmem:[%s1225] ss:$2 sm:$0xff] %v825
        %v1227 = vld.sshfl [vmem:[#allocation1] sm:$0xff pattern:$0x75316420]
        %v1228 = vld.sshfl [vmem:[#allocation1 + $0x8] sm:$0xff pattern:$0x75316420]
        %v1229 = vld.sshfl [vmem:[#allocation1 + $0x10] sm:$0xff pattern:$0x75316420]
        %v1230 = vld.sshfl [vmem:[#allocation1 + $0x18] sm:$0xff pattern:$0x75316420]
        %v1232 = vsel %vm1132, %v1130, 0
        %v1234 = vsel %vm819, %v1227, 0
        %v1236 = vsel %vm819, %v1228, 0
        %v1238 = vsel %vm819, %v1229, 0
        %v1240 = vsel %vm819, %v1230, 0
        %1242 = vmatpush.msra.mxu0 0.0
        %1243 = vmatpush.msra.mxu0 0.0
        %1244 = vmatpush.msra.mxu0 0.0
        %1245 = vmatpush.msra.mxu0 0.0
        %1246 = vmatpush.msra.mxu0 0.0
        %1247 = vmatpush.msra.mxu0 0.0
        %1248 = vmatpush.msra.mxu0 0.0
        %1249 = vmatpush.msra.mxu0 0.0
        %1250 = vmatpush.msra.mxu0 0.0
        %1251 = vmatpush.msra.mxu0 0.0
        %1252 = vmatpush.msra.mxu0 0.0
        %1253 = vmatpush.msra.mxu0 0.0
        %1254 = vmatpush.msra.mxu0 0.0
        %1255 = vmatpush.msra.mxu0 0.0
        %1256 = vmatpush.msra.mxu0 0.0
        %1257 = vmatpush.msra.mxu0 %v1234
        %1258 = vmatmul.f32.gmra.mxu0 %v1232
        %v1259 = vpop.f32.mrf.mxu0
        %v1260 = vadd.f32 %v1162, %v1259
        %1261 = vdwg.mxu0
        %1262 = vmatpush.msra.mxu0 0.0
        %1263 = vmatpush.msra.mxu0 0.0
        %1264 = vmatpush.msra.mxu0 0.0
        %1265 = vmatpush.msra.mxu0 0.0
        %1266 = vmatpush.msra.mxu0 0.0
        %1267 = vmatpush.msra.mxu0 0.0
        %1268 = vmatpush.msra.mxu0 0.0
        %1269 = vmatpush.msra.mxu0 0.0
        %1270 = vmatpush.msra.mxu0 0.0
        %1271 = vmatpush.msra.mxu0 0.0
        %1272 = vmatpush.msra.mxu0 0.0
        %1273 = vmatpush.msra.mxu0 0.0
        %1274 = vmatpush.msra.mxu0 0.0
        %1275 = vmatpush.msra.mxu0 0.0
        %1276 = vmatpush.msra.mxu0 0.0
        %1277 = vmatpush.msra.mxu0 %v1236
        %1278 = vmatmul.f32.gmra.mxu0 %v1232
        %v1279 = vpop.f32.mrf.mxu0
        %v1280 = vadd.f32 %v1182, %v1279
        %1281 = vdwg.mxu0
        %1282 = vmatpush.msra.mxu0 0.0
        %1283 = vmatpush.msra.mxu0 0.0
        %1284 = vmatpush.msra.mxu0 0.0
        %1285 = vmatpush.msra.mxu0 0.0
        %1286 = vmatpush.msra.mxu0 0.0
        %1287 = vmatpush.msra.mxu0 0.0
        %1288 = vmatpush.msra.mxu0 0.0
        %1289 = vmatpush.msra.mxu0 0.0
        %1290 = vmatpush.msra.mxu0 0.0
        %1291 = vmatpush.msra.mxu0 0.0
        %1292 = vmatpush.msra.mxu0 0.0
        %1293 = vmatpush.msra.mxu0 0.0
        %1294 = vmatpush.msra.mxu0 0.0
        %1295 = vmatpush.msra.mxu0 0.0
        %1296 = vmatpush.msra.mxu0 0.0
        %1297 = vmatpush.msra.mxu0 %v1238
        %1298 = vmatmul.f32.gmra.mxu0 %v1232
        %v1299 = vpop.f32.mrf.mxu0
        %v1300 = vadd.f32 %v1202, %v1299
        %1301 = vdwg.mxu0
        %1302 = vmatpush.msra.mxu0 0.0
        %1303 = vmatpush.msra.mxu0 0.0
        %1304 = vmatpush.msra.mxu0 0.0
        %1305 = vmatpush.msra.mxu0 0.0
        %1306 = vmatpush.msra.mxu0 0.0
        %1307 = vmatpush.msra.mxu0 0.0
        %1308 = vmatpush.msra.mxu0 0.0
        %1309 = vmatpush.msra.mxu0 0.0
        %1310 = vmatpush.msra.mxu0 0.0
        %1311 = vmatpush.msra.mxu0 0.0
        %1312 = vmatpush.msra.mxu0 0.0
        %1313 = vmatpush.msra.mxu0 0.0
        %1314 = vmatpush.msra.mxu0 0.0
        %1315 = vmatpush.msra.mxu0 0.0
        %1316 = vmatpush.msra.mxu0 0.0
        %1317 = vmatpush.msra.mxu0 %v1240
        %1318 = vmatmul.f32.gmra.mxu0 %v1232
        %v1319 = vpop.f32.mrf.mxu0
        %v1320 = vadd.f32 %v1222, %v1319
        %1321 = vdwg.mxu0
        %v1322 = vld [vmem:[%s4] sm:$0xff]
        %v1324 = vsel %vm1132, %v1322, 0
        %v1327 = vsel %vm819, %v1126, 0
        %v1330 = vsel %vm819, %v1127, 0
        %v1333 = vsel %vm819, %v1128, 0
        %v1336 = vsel %vm819, %v1129, 0
        %1338 = vmatpush.msra.mxu0 0.0
        %1339 = vmatpush.msra.mxu0 0.0
        %1340 = vmatpush.msra.mxu0 0.0
        %1341 = vmatpush.msra.mxu0 0.0
        %1342 = vmatpush.msra.mxu0 0.0
        %1343 = vmatpush.msra.mxu0 0.0
        %1344 = vmatpush.msra.mxu0 0.0
        %1345 = vmatpush.msra.mxu0 0.0
        %1346 = vmatpush.msra.mxu0 0.0
        %1347 = vmatpush.msra.mxu0 0.0
        %1348 = vmatpush.msra.mxu0 0.0
        %1349 = vmatpush.msra.mxu0 0.0
        %1350 = vmatpush.msra.mxu0 0.0
        %1351 = vmatpush.msra.mxu0 0.0
        %1352 = vmatpush.msra.mxu0 0.0
        %1353 = vmatpush.msra.mxu0 %v1327
        %1354 = vmatmul.f32.gmra.mxu0 %v1324
        %v1355 = vpop.f32.mrf.mxu0
        %v1356 = vadd.f32 0.0, %v1355
        %1357 = vdwg.mxu0
        %1358 = vmatpush.msra.mxu0 0.0
        %1359 = vmatpush.msra.mxu0 0.0
        %1360 = vmatpush.msra.mxu0 0.0
        %1361 = vmatpush.msra.mxu0 0.0
        %1362 = vmatpush.msra.mxu0 0.0
        %1363 = vmatpush.msra.mxu0 0.0
        %1364 = vmatpush.msra.mxu0 0.0
        %1365 = vmatpush.msra.mxu0 0.0
        %1366 = vmatpush.msra.mxu0 0.0
        %1367 = vmatpush.msra.mxu0 0.0
        %1368 = vmatpush.msra.mxu0 0.0
        %1369 = vmatpush.msra.mxu0 0.0
        %1370 = vmatpush.msra.mxu0 0.0
        %1371 = vmatpush.msra.mxu0 0.0
        %1372 = vmatpush.msra.mxu0 0.0
        %1373 = vmatpush.msra.mxu0 %v1330
        %1374 = vmatmul.f32.gmra.mxu0 %v1324
        %v1375 = vpop.f32.mrf.mxu0
        %v1376 = vadd.f32 0.0, %v1375
        %1377 = vdwg.mxu0
        %1378 = vmatpush.msra.mxu0 0.0
        %1379 = vmatpush.msra.mxu0 0.0
        %1380 = vmatpush.msra.mxu0 0.0
        %1381 = vmatpush.msra.mxu0 0.0
        %1382 = vmatpush.msra.mxu0 0.0
        %1383 = vmatpush.msra.mxu0 0.0
        %1384 = vmatpush.msra.mxu0 0.0
        %1385 = vmatpush.msra.mxu0 0.0
        %1386 = vmatpush.msra.mxu0 0.0
        %1387 = vmatpush.msra.mxu0 0.0
        %1388 = vmatpush.msra.mxu0 0.0
        %1389 = vmatpush.msra.mxu0 0.0
        %1390 = vmatpush.msra.mxu0 0.0
        %1391 = vmatpush.msra.mxu0 0.0
        %1392 = vmatpush.msra.mxu0 0.0
        %1393 = vmatpush.msra.mxu0 %v1333
        %1394 = vmatmul.f32.gmra.mxu0 %v1324
        %v1395 = vpop.f32.mrf.mxu0
        %v1396 = vadd.f32 0.0, %v1395
        %1397 = vdwg.mxu0
        %1398 = vmatpush.msra.mxu0 0.0
        %1399 = vmatpush.msra.mxu0 0.0
        %1400 = vmatpush.msra.mxu0 0.0
        %1401 = vmatpush.msra.mxu0 0.0
        %1402 = vmatpush.msra.mxu0 0.0
        %1403 = vmatpush.msra.mxu0 0.0
        %1404 = vmatpush.msra.mxu0 0.0
        %1405 = vmatpush.msra.mxu0 0.0
        %1406 = vmatpush.msra.mxu0 0.0
        %1407 = vmatpush.msra.mxu0 0.0
        %1408 = vmatpush.msra.mxu0 0.0
        %1409 = vmatpush.msra.mxu0 0.0
        %1410 = vmatpush.msra.mxu0 0.0
        %1411 = vmatpush.msra.mxu0 0.0
        %1412 = vmatpush.msra.mxu0 0.0
        %1413 = vmatpush.msra.mxu0 %v1336
        %1414 = vmatmul.f32.gmra.mxu0 %v1324
        %v1415 = vpop.f32.mrf.mxu0
        %v1416 = vadd.f32 0.0, %v1415
        %1417 = vdwg.mxu0
        %v1418 = vadd.f32 %v1260, %v1356
        %v1419 = vadd.f32 %v1280, %v1376
        %v1420 = vadd.f32 %v1300, %v1396
        %v1421 = vadd.f32 %v1320, %v1416
        %v1422 = vld [vmem:[%s5] sm:$0xff]
        %1424 = vset.pattern.permute.xlu0 0
        %1425 = vperm.xlu0 %1424, %v1422
        %v1426 = vpop.permute.xlu0 %1425
        %v1428 = vadd.f32 %v1418, %v1426
        %v1429 = vadd.f32 %v1419, %v1426
        %v1430 = vadd.f32 %v1420, %v1426
        %v1431 = vadd.f32 %v1421, %v1426
        %v1432 = vxor.u32 %v1428, 2147483648
        %v1433 = vxor.u32 %v1429, 2147483648
        %v1434 = vxor.u32 %v1430, 2147483648
        %v1435 = vxor.u32 %v1431, 2147483648
        %v1436 = vmul.f32 %v1432, 1.442695
        %v1437 = vpow.pop %v1436
        %v1438 = vmul.f32 %v1433, 1.442695
        %v1439 = vpow.pop %v1438
        %v1440 = vmul.f32 %v1434, 1.442695
        %v1441 = vpow.pop %v1440
        %v1442 = vmul.f32 %v1435, 1.442695
        %v1443 = vpow.pop %v1442
        %v1444 = vadd.f32 %v1437, 1.0
        %v1445 = vadd.f32 %v1439, 1.0
        %v1446 = vadd.f32 %v1441, 1.0
        %v1447 = vadd.f32 %v1443, 1.0
        %v1448 = vrcp.pop %v1444
        %v1449 = vmul.f32 %v1444, %v1448
        %v1450 = vsub.f32 1.0, %v1449
        %v1451 = vmul.f32 %v1448, %v1450
        %v1452 = vadd.f32 %v1448, %v1451
        %vm1453 = vweird.f32 %v1444
        %vm1454 = vweird.f32 %v1448
        %vm1455 = vmor %vm1453, %vm1454
        %v1456 = vsel %vm1455, %v1448, %v1452
        %v1457 = vand.u32 2147483647, %v1444
        %vm1458 = vcmp.eq.f32.partialorder %v1457, 8.507059e+37
        %v1459 = vand.u32 %v1444, 2147483648
        %v1460 = vor.u32 1.1754944e-38, %v1459
        %v1461 = vsel %vm1458, %v1460, %v1456
        %v1462 = vmul.f32 1.0, %v1461
        %v1463 = vrcp.pop %v1445
        %v1464 = vmul.f32 %v1445, %v1463
        %v1465 = vsub.f32 1.0, %v1464
        %v1466 = vmul.f32 %v1463, %v1465
        %v1467 = vadd.f32 %v1463, %v1466
        %vm1468 = vweird.f32 %v1445
        %vm1469 = vweird.f32 %v1463
        %vm1470 = vmor %vm1468, %vm1469
        %v1471 = vsel %vm1470, %v1463, %v1467
        %v1472 = vand.u32 2147483647, %v1445
        %vm1473 = vcmp.eq.f32.partialorder %v1472, 8.507059e+37
        %v1474 = vand.u32 %v1445, 2147483648
        %v1475 = vor.u32 1.1754944e-38, %v1474
        %v1476 = vsel %vm1473, %v1475, %v1471
        %v1477 = vmul.f32 1.0, %v1476
        %v1478 = vrcp.pop %v1446
        %v1479 = vmul.f32 %v1446, %v1478
        %v1480 = vsub.f32 1.0, %v1479
        %v1481 = vmul.f32 %v1478, %v1480
        %v1482 = vadd.f32 %v1478, %v1481
        %vm1483 = vweird.f32 %v1446
        %vm1484 = vweird.f32 %v1478
        %vm1485 = vmor %vm1483, %vm1484
        %v1486 = vsel %vm1485, %v1478, %v1482
        %v1487 = vand.u32 2147483647, %v1446
        %vm1488 = vcmp.eq.f32.partialorder %v1487, 8.507059e+37
        %v1489 = vand.u32 %v1446, 2147483648
        %v1490 = vor.u32 1.1754944e-38, %v1489
        %v1491 = vsel %vm1488, %v1490, %v1486
        %v1492 = vmul.f32 1.0, %v1491
        %v1493 = vrcp.pop %v1447
        %v1494 = vmul.f32 %v1447, %v1493
        %v1495 = vsub.f32 1.0, %v1494
        %v1496 = vmul.f32 %v1493, %v1495
        %v1497 = vadd.f32 %v1493, %v1496
        %vm1498 = vweird.f32 %v1447
        %vm1499 = vweird.f32 %v1493
        %vm1500 = vmor %vm1498, %vm1499
        %v1501 = vsel %vm1500, %v1493, %v1497
        %v1502 = vand.u32 2147483647, %v1447
        %vm1503 = vcmp.eq.f32.partialorder %v1502, 8.507059e+37
        %v1504 = vand.u32 %v1447, 2147483648
        %v1505 = vor.u32 1.1754944e-38, %v1504
        %v1506 = vsel %vm1503, %v1505, %v1501
        %v1507 = vmul.f32 1.0, %v1506
        %v1508 = vmul.f32 %v1428, %v1462
        %v1509 = vmul.f32 %v1429, %v1477
        %v1510 = vmul.f32 %v1430, %v1492
        %v1511 = vmul.f32 %v1431, %v1507
        %1512 = vst [vmem:[%s502] sm:$0xff] %v1508
        %1513 = vst [vmem:[%s502 + $0x8] sm:$0xff] %v1509
        %1514 = vst [vmem:[%s502 + $0x10] sm:$0xff] %v1510
        %1515 = vst [vmem:[%s502 + $0x18] sm:$0xff] %v1511
        %s1516 = sand.u32 %s303, 1
        %s1517 = scalar_lea.sflag [#allocation4], %s1516
        %s1518 = sand.u32 %s303, 1
        %s1519 = smul.addr %s1518, 32
        %s1520 = scalar_lea.vmem [#allocation11], %s1519
        // Predicated region
        $region81: #{tpu_custom_call.1} parent=63 // pred_check
          %p1521 = pneg %p313
        $region82: #{tpu_custom_call.1} parent=63 // pred_check_branch
          %1523 = sbr.rel (%p1521) target = $region84
        $region83: #{tpu_custom_call.1} parent=63 // pred_region
          %s1524 = smul.u32 4, %s36
          %1526 = vsyncadd %s1517, 0
          %s1527 = smul.addr %s35, 8
          %s1528 = sadd.s32 %s1524, %s1527
          %s1529 = smul.addr %s1528, 8
          %s1530 = scalar_lea.hbm %s11, %s1529
          %s1532 = sshll.u32 %s1520, 4
          %s1533 = int_to_ptr.vmem [resolvable:$true] %s1532
          %s1534 = sshll.u32 %s1530, 4
          %s1535 = int_to_ptr.hbm [resolvable:$true] %s1534
          %1537 = dma.vmem_to_hbm [thread:$0]  %s1533, 512, %s1535, %s1517
        $region84: #{tpu_custom_call.1} parent=63 // pred_fallthru
          _
      $region64: #{tpu_custom_call.1} parent=5 // pred_fallthru
        _
      %p1538 = scmp.le.s32.totalorder 2, %s26
      // Predicated region
      $region85: #{tpu_custom_call.1} parent=5 // pred_check
        %p1539 = pneg %p1538
      $region86: #{tpu_custom_call.1} parent=5 // pred_check_branch
        %1541 = sbr.rel (%p1539) target = $region88
      $region87: #{tpu_custom_call.1} parent=5 // pred_region
        %s1542 = ssub.s32 %s26, 2
        // Predicated region
        $region89: #{tpu_custom_call.1} parent=87 // pred_check
          %p1543 = pneg %p319
        $region90: #{tpu_custom_call.1} parent=87 // pred_check_branch
          %1545 = sbr.rel (%p1543) target = $region92
        $region91: #{tpu_custom_call.1} parent=87 // pred_region
          %s1546 = sand.u32 %s304, 1
          %s1547 = scalar_lea.sflag [#allocation4], %s1546
          %s1548 = sand.u32 %s304, 1
          %s1549 = smul.addr %s1548, 32
          %s1550 = scalar_lea.vmem [#allocation11], %s1549
          %1552 = dma.done %s1547, 512
        $region92: #{tpu_custom_call.1} parent=87 // pred_fallthru
          _
      $region88: #{tpu_custom_call.1} parent=5 // pred_fallthru
        _
    $region6: #{tpu_custom_call.1} parent=1 // loop_footer
      %s30 = sadd.s32 1, %s26
    $region7: #{tpu_custom_call.1} parent=1 // loop_footer_branch
      %25 = sbr.rel target = $region3
    $region8: #{tpu_custom_call.1} parent=1 // loop_exit
      _
    %1553 = vsyncpa [#allocation3], 1
    %s1554 = scalar_lea.sflag [#allocation3], 1
    %1555 = vsyncpa %s1554, 1
    %1556 = vsyncpa [#allocation10], 1
    %s1557 = scalar_lea.sflag [#allocation10], 1
    %1558 = vsyncpa %s1557, 1
    %1559 = vsyncpa [#allocation4], 1
    %s1560 = scalar_lea.sflag [#allocation4], 1
    %1561 = vsyncpa %s1560, 1
    %1562 = vsyncpa [#allocation5], 1
    %s1563 = scalar_lea.sflag [#allocation5], 1
    %1564 = vsyncpa %s1563, 1
    %1565 = vsyncpa [#allocation7], 1

</llo_original>
